<compile_context>
chip_gen: v6e
topology: v6e:2x2x1
jax: 0.10.0
libtpu: 0.0.40
codegen_flags: <defaults>
</compile_context>

<pallas_src>
import functools

import jax
import jax.numpy as jnp
from jax.experimental import pallas as pl
from jax.experimental.pallas import tpu as pltpu


IN_FEATS = 35          # real input width
IN_PAD = 128           # input padded to a full lane group
OUT_PAD = 128          # final output padded to 128 lanes (lane-dense store)
HIDDEN = (64, 128, 256, 128)


def mlp_kernel(x_ref,
               w1_ref, c1_ref,
               w2_ref, c2_ref,
               w3_ref, c3_ref,
               w4_ref, c4_ref,
               w5_ref, c5_ref,
               o_ref):
    """Fused 5-layer MLP, BatchNorm folded into weights/bias (eval mode).

    Matmuls run bf16 x bf16 -> f32 on the MXU; bias + ReLU in f32.
    Dropout(0.45) is identity in eval mode.
    """
    h = x_ref[...]                                            # (TB, 128) bf16

    def layer(h, w_ref, c_ref):
        z = jnp.dot(h, w_ref[...], preferred_element_type=jnp.float32)
        z = z + c_ref[...]                                    # folded BN bias
        return jnp.maximum(z, 0.0).astype(jnp.bfloat16)

    h = layer(h, w1_ref, c1_ref)      # (TB, 64)
    h = layer(h, w2_ref, c2_ref)      # (TB, 128)
    h = layer(h, w3_ref, c3_ref)      # (TB, 256)
    h = layer(h, w4_ref, c4_ref)      # (TB, 128)

    # final Linear(128, 1), padded to 128 output lanes -> unmasked stores
    o_ref[...] = (jnp.dot(h, w5_ref[...], preferred_element_type=jnp.float32)
                  + c5_ref[...])


def init_params(key):
    """Deterministic parameters matching the PyTorch module's shapes."""
    dims = [(35, 64), (64, 128), (128, 256), (256, 128), (128, 1)]
    raw = {}
    for i, (fin, fout) in enumerate(dims, start=1):
        key, kw, kb = jax.random.split(key, 3)
        bound = 1.0 / jnp.sqrt(fin)
        raw[f"w{i}"] = jax.random.uniform(kw, (fin, fout), jnp.float32,
                                          -bound, bound)
        raw[f"b{i}"] = jax.random.uniform(kb, (1, fout), jnp.float32,
                                          -bound, bound)
    # BatchNorm (eval mode: running stats) for the 4 hidden layers.
    eps = 1e-5
    for i, f in enumerate(HIDDEN, start=1):
        key, kg, kbe, km, kv = jax.random.split(key, 5)
        gamma = 1.0 + 0.1 * jax.random.normal(kg, (1, f), jnp.float32)
        beta = 0.1 * jax.random.normal(kbe, (1, f), jnp.float32)
        mean = 0.05 * jax.random.normal(km, (1, f), jnp.float32)
        var = jnp.abs(1.0 + 0.1 * jax.random.normal(kv, (1, f), jnp.float32))
        raw[f"s{i}"] = gamma / jnp.sqrt(var + eps)
        raw[f"t{i}"] = beta - mean * raw[f"s{i}"]
    return raw


def fold_params(raw):
    """Fold BN into W/bias, pad ragged dims, cast matmul operands to bf16."""
    folded = {}
    for i in range(1, 5):
        w = raw[f"w{i}"] * raw[f"s{i}"]                       # column scale
        c = raw[f"b{i}"] * raw[f"s{i}"] + raw[f"t{i}"]        # folded bias
        if i == 1:  # pad K: 35 -> 128 (matches zero-padded input lanes)
            w = jnp.zeros((IN_PAD, w.shape[1]), jnp.float32).at[:IN_FEATS].set(w)
        folded[f"w{i}"] = w.astype(jnp.bfloat16)
        folded[f"c{i}"] = c                                   # bias stays f32
    # final layer: pad the single output column to 128 lanes
    w5 = jnp.zeros((128, OUT_PAD), jnp.float32).at[:, :1].set(raw["w5"])
    c5 = jnp.zeros((1, OUT_PAD), jnp.float32).at[:, :1].set(raw["b5"])
    folded["w5"] = w5.astype(jnp.bfloat16)
    folded["c5"] = c5
    return folded


@functools.partial(jax.jit, static_argnames=("tb",))
def net_forward(x, folded, tb=256):
    B = x.shape[0]
    n_tiles = pl.cdiv(B, tb)
    Bp = n_tiles * tb

    # pad batch to a tile multiple and input features to 128 lanes (zeros)
    x_pad = jnp.zeros((Bp, IN_PAD), jnp.bfloat16)
    x_pad = x_pad.at[:B, :IN_FEATS].set(x.astype(jnp.bfloat16))

    weights = [folded["w1"], folded["c1"],
               folded["w2"], folded["c2"],
               folded["w3"], folded["c3"],
               folded["w4"], folded["c4"],
               folded["w5"], folded["c5"]]
    weight_specs = [pl.BlockSpec(w.shape, lambda i: (0, 0)) for w in weights]

    flops = 2 * Bp * (IN_PAD * 64 + 64 * 128 + 128 * 256 + 256 * 128
                      + 128 * OUT_PAD)
    bytes_accessed = (x_pad.size * 2
                      + sum(int(w.size) * w.dtype.itemsize for w in weights)
                      + Bp * OUT_PAD * 4)

    out = pl.pallas_call(
        mlp_kernel,
        out_shape=jax.ShapeDtypeStruct((Bp, OUT_PAD), jnp.float32),
        grid=(n_tiles,),
        in_specs=[pl.BlockSpec((tb, IN_PAD), lambda i: (i, 0))] + weight_specs,
        out_specs=pl.BlockSpec((tb, OUT_PAD), lambda i: (i, 0)),
        compiler_params=pltpu.CompilerParams(
            dimension_semantics=("parallel",)),
        cost_estimate=pl.CostEstimate(
            flops=flops, transcendentals=0, bytes_accessed=bytes_accessed),
    )(x_pad, *weights)

    # padded rows / padded output lanes are garbage/zero by construction;
    # slice back to the logical (B, 1) result.
    return out[:B, :1]


def reference_forward_folded(x, folded):
    """Pure-JAX reference using the same math/dtypes as the kernel."""
    h = jnp.zeros((x.shape[0], IN_PAD), jnp.bfloat16)
    h = h.at[:, :IN_FEATS].set(x.astype(jnp.bfloat16))
    for i in range(1, 5):
        z = jnp.dot(h, folded[f"w{i}"], preferred_element_type=jnp.float32)
        h = jnp.maximum(z + folded[f"c{i}"], 0.0).astype(jnp.bfloat16)
    out = (jnp.dot(h, folded["w5"], preferred_element_type=jnp.float32)
           + folded["c5"])
    return out[:, :1]


def reference_forward_f32(x, raw):
    """Full-precision reference of the original (un-folded) module math."""
    h = x
    for i in range(1, 5):
        z = h @ raw[f"w{i}"] + raw[f"b{i}"]
        h = jnp.maximum(z * raw[f"s{i}"] + raw[f"t{i}"], 0.0)
    return h @ raw["w5"] + raw["b5"]


if __name__ == "__main__":
    key = jax.random.PRNGKey(0)
    kx, kp = jax.random.split(key)

    B = 2
    x = jax.random.normal(kx, (B, IN_FEATS), jnp.float32)
    raw = init_params(kp)
    folded = fold_params(raw)

    out = net_forward(x, folded, tb=256)
    out = jax.block_until_ready(out)
    assert out.shape == (B, 1), out.shape

    # exact-math check (same bf16/f32 pattern as the kernel)
    ref_bf16 = reference_forward_folded(x, folded)
    assert jnp.allclose(out, ref_bf16, atol=2e-3, rtol=2e-3), (out, ref_bf16)

    # sanity check against the original f32 BN formulation (bf16 rounding slack)
    ref_f32 = reference_forward_f32(x, raw)
    assert jnp.allclose(out, ref_f32, atol=5e-2, rtol=5e-2), (out, ref_f32)

    print("KERNEL_OK")
</pallas_src>

<mosaic_0001>
module attributes {stable_mosaic.version = 11 : i64} {
  func.func @mlp_kernel(%arg0: i32, %arg1: memref<256x128xbf16, #tpu.memory_space<vmem>>, %arg2: memref<128x64xbf16, #tpu.memory_space<vmem>>, %arg3: memref<1x64xf32, #tpu.memory_space<vmem>>, %arg4: memref<64x128xbf16, #tpu.memory_space<vmem>>, %arg5: memref<1x128xf32, #tpu.memory_space<vmem>>, %arg6: memref<128x256xbf16, #tpu.memory_space<vmem>>, %arg7: memref<1x256xf32, #tpu.memory_space<vmem>>, %arg8: memref<256x128xbf16, #tpu.memory_space<vmem>>, %arg9: memref<1x128xf32, #tpu.memory_space<vmem>>, %arg10: memref<128x128xbf16, #tpu.memory_space<vmem>>, %arg11: memref<1x128xf32, #tpu.memory_space<vmem>>, %arg12: memref<256x128xf32, #tpu.memory_space<vmem>>) attributes {dimension_semantics = [#tpu.dimension_semantics<parallel>], iteration_bounds = array<i64: 1>, scalar_prefetch = 0 : i64, scratch_operands = 0 : i64, tpu.core_type = #tpu.core_type<tc>, window_params = [{transform_indices = @transform_0, window_bounds = array<i64: 256, 128>}, {pipeline_mode = #tpu.pipeline_mode<synchronous>, transform_indices = @transform_1, window_bounds = array<i64: 128, 64>}, {pipeline_mode = #tpu.pipeline_mode<synchronous>, transform_indices = @transform_2, window_bounds = array<i64: 1, 64>}, {pipeline_mode = #tpu.pipeline_mode<synchronous>, transform_indices = @transform_3, window_bounds = array<i64: 64, 128>}, {pipeline_mode = #tpu.pipeline_mode<synchronous>, transform_indices = @transform_4, window_bounds = array<i64: 1, 128>}, {pipeline_mode = #tpu.pipeline_mode<synchronous>, transform_indices = @transform_5, window_bounds = array<i64: 128, 256>}, {pipeline_mode = #tpu.pipeline_mode<synchronous>, transform_indices = @transform_6, window_bounds = array<i64: 1, 256>}, {pipeline_mode = #tpu.pipeline_mode<synchronous>, transform_indices = @transform_7, window_bounds = array<i64: 256, 128>}, {pipeline_mode = #tpu.pipeline_mode<synchronous>, transform_indices = @transform_8, window_bounds = array<i64: 1, 128>}, {pipeline_mode = #tpu.pipeline_mode<synchronous>, transform_indices = @transform_9, window_bounds = array<i64: 128, 128>}, {pipeline_mode = #tpu.pipeline_mode<synchronous>, transform_indices = @transform_10, window_bounds = array<i64: 1, 128>}, {transform_indices = @transform_11, window_bounds = array<i64: 256, 128>}]} {
    %c0 = arith.constant 0 : index
    %c0_0 = arith.constant 0 : index
    %0 = vector.load %arg1[%c0, %c0_0] : memref<256x128xbf16, #tpu.memory_space<vmem>>, vector<256x128xbf16>
    %c0_1 = arith.constant 0 : index
    %c0_2 = arith.constant 0 : index
    %1 = vector.load %arg2[%c0_1, %c0_2] : memref<128x64xbf16, #tpu.memory_space<vmem>>, vector<128x64xbf16>
    %cst = arith.constant dense<0.000000e+00> : vector<256x64xf32>
    %2 = tpu.matmul %0, %1, %cst {dimension_numbers = #tpu.dot_dimension_numbers<[1], [0], [0], [1], [0, 0, 1, 1], [], []>} : vector<256x128xbf16>, vector<128x64xbf16>, vector<256x64xf32> -> vector<256x64xf32>
    %c0_3 = arith.constant 0 : index
    %c0_4 = arith.constant 0 : index
    %3 = vector.load %arg3[%c0_3, %c0_4] : memref<1x64xf32, #tpu.memory_space<vmem>>, vector<1x64xf32>
    %4 = vector.broadcast %3 : vector<1x64xf32> to vector<256x64xf32>
    %5 = arith.addf %2, %4 : vector<256x64xf32>
    %cst_5 = arith.constant 0.000000e+00 : f32
    %6 = vector.broadcast %cst_5 : f32 to vector<256x64xf32>
    %7 = arith.maximumf %5, %6 : vector<256x64xf32>
    %8 = arith.truncf %7 : vector<256x64xf32> to vector<256x64xbf16>
    %c0_6 = arith.constant 0 : index
    %c0_7 = arith.constant 0 : index
    %9 = vector.load %arg4[%c0_6, %c0_7] : memref<64x128xbf16, #tpu.memory_space<vmem>>, vector<64x128xbf16>
    %cst_8 = arith.constant dense<0.000000e+00> : vector<256x128xf32>
    %10 = tpu.matmul %8, %9, %cst_8 {dimension_numbers = #tpu.dot_dimension_numbers<[1], [0], [0], [1], [0, 0, 1, 1], [], []>} : vector<256x64xbf16>, vector<64x128xbf16>, vector<256x128xf32> -> vector<256x128xf32>
    %c0_9 = arith.constant 0 : index
    %c0_10 = arith.constant 0 : index
    %11 = vector.load %arg5[%c0_9, %c0_10] : memref<1x128xf32, #tpu.memory_space<vmem>>, vector<1x128xf32>
    %12 = vector.broadcast %11 : vector<1x128xf32> to vector<256x128xf32>
    %13 = arith.addf %10, %12 : vector<256x128xf32>
    %cst_11 = arith.constant 0.000000e+00 : f32
    %14 = vector.broadcast %cst_11 : f32 to vector<256x128xf32>
    %15 = arith.maximumf %13, %14 : vector<256x128xf32>
    %16 = arith.truncf %15 : vector<256x128xf32> to vector<256x128xbf16>
    %c0_12 = arith.constant 0 : index
    %c0_13 = arith.constant 0 : index
    %17 = vector.load %arg6[%c0_12, %c0_13] : memref<128x256xbf16, #tpu.memory_space<vmem>>, vector<128x256xbf16>
    %cst_14 = arith.constant dense<0.000000e+00> : vector<256x256xf32>
    %18 = tpu.matmul %16, %17, %cst_14 {dimension_numbers = #tpu.dot_dimension_numbers<[1], [0], [0], [1], [0, 0, 1, 1], [], []>} : vector<256x128xbf16>, vector<128x256xbf16>, vector<256x256xf32> -> vector<256x256xf32>
    %c0_15 = arith.constant 0 : index
    %c0_16 = arith.constant 0 : index
    %19 = vector.load %arg7[%c0_15, %c0_16] : memref<1x256xf32, #tpu.memory_space<vmem>>, vector<1x256xf32>
    %20 = vector.broadcast %19 : vector<1x256xf32> to vector<256x256xf32>
    %21 = arith.addf %18, %20 : vector<256x256xf32>
    %cst_17 = arith.constant 0.000000e+00 : f32
    %22 = vector.broadcast %cst_17 : f32 to vector<256x256xf32>
    %23 = arith.maximumf %21, %22 : vector<256x256xf32>
    %24 = arith.truncf %23 : vector<256x256xf32> to vector<256x256xbf16>
    %c0_18 = arith.constant 0 : index
    %c0_19 = arith.constant 0 : index
    %25 = vector.load %arg8[%c0_18, %c0_19] : memref<256x128xbf16, #tpu.memory_space<vmem>>, vector<256x128xbf16>
    %cst_20 = arith.constant dense<0.000000e+00> : vector<256x128xf32>
    %26 = tpu.matmul %24, %25, %cst_20 {dimension_numbers = #tpu.dot_dimension_numbers<[1], [0], [0], [1], [0, 0, 1, 1], [], []>} : vector<256x256xbf16>, vector<256x128xbf16>, vector<256x128xf32> -> vector<256x128xf32>
    %c0_21 = arith.constant 0 : index
    %c0_22 = arith.constant 0 : index
    %27 = vector.load %arg9[%c0_21, %c0_22] : memref<1x128xf32, #tpu.memory_space<vmem>>, vector<1x128xf32>
    %28 = vector.broadcast %27 : vector<1x128xf32> to vector<256x128xf32>
    %29 = arith.addf %26, %28 : vector<256x128xf32>
    %cst_23 = arith.constant 0.000000e+00 : f32
    %30 = vector.broadcast %cst_23 : f32 to vector<256x128xf32>
    %31 = arith.maximumf %29, %30 : vector<256x128xf32>
    %32 = arith.truncf %31 : vector<256x128xf32> to vector<256x128xbf16>
    %c0_24 = arith.constant 0 : index
    %c0_25 = arith.constant 0 : index
    %33 = vector.load %arg10[%c0_24, %c0_25] : memref<128x128xbf16, #tpu.memory_space<vmem>>, vector<128x128xbf16>
    %cst_26 = arith.constant dense<0.000000e+00> : vector<256x128xf32>
    %34 = tpu.matmul %32, %33, %cst_26 {dimension_numbers = #tpu.dot_dimension_numbers<[1], [0], [0], [1], [0, 0, 1, 1], [], []>} : vector<256x128xbf16>, vector<128x128xbf16>, vector<256x128xf32> -> vector<256x128xf32>
    %c0_27 = arith.constant 0 : index
    %c0_28 = arith.constant 0 : index
    %35 = vector.load %arg11[%c0_27, %c0_28] : memref<1x128xf32, #tpu.memory_space<vmem>>, vector<1x128xf32>
    %36 = vector.broadcast %35 : vector<1x128xf32> to vector<256x128xf32>
    %37 = arith.addf %34, %36 : vector<256x128xf32>
    %c0_29 = arith.constant 0 : index
    %c0_30 = arith.constant 0 : index
    %38 = vector.load %arg12[%c0_29, %c0_30] : memref<256x128xf32, #tpu.memory_space<vmem>>, vector<256x128xf32>
    tpu.vector_store %arg12[%c0_29, %c0_30], %37 {strides = array<i32>} : memref<256x128xf32, #tpu.memory_space<vmem>>, vector<256x128xf32>,
    return
  }
  func.func @transform_0(%arg0: i32) -> (i32, i32) {
    %c0_i32 = arith.constant 0 : i32
    %c0_i32_0 = arith.constant 0 : i32
    return %arg0, %c0_i32 : i32, i32
  }
  func.func @transform_1(%arg0: i32) -> (i32, i32) {
    %c0_i32 = arith.constant 0 : i32
    %c0_i32_0 = arith.constant 0 : i32
    %c0_i32_1 = arith.constant 0 : i32
    return %c0_i32, %c0_i32_0 : i32, i32
  }
  func.func @transform_2(%arg0: i32) -> (i32, i32) {
    %c0_i32 = arith.constant 0 : i32
    %c0_i32_0 = arith.constant 0 : i32
    %c0_i32_1 = arith.constant 0 : i32
    return %c0_i32, %c0_i32_0 : i32, i32
  }
  func.func @transform_3(%arg0: i32) -> (i32, i32) {
    %c0_i32 = arith.constant 0 : i32
    %c0_i32_0 = arith.constant 0 : i32
    %c0_i32_1 = arith.constant 0 : i32
    return %c0_i32, %c0_i32_0 : i32, i32
  }
  func.func @transform_4(%arg0: i32) -> (i32, i32) {
    %c0_i32 = arith.constant 0 : i32
    %c0_i32_0 = arith.constant 0 : i32
    %c0_i32_1 = arith.constant 0 : i32
    return %c0_i32, %c0_i32_0 : i32, i32
  }
  func.func @transform_5(%arg0: i32) -> (i32, i32) {
    %c0_i32 = arith.constant 0 : i32
    %c0_i32_0 = arith.constant 0 : i32
    %c0_i32_1 = arith.constant 0 : i32
    return %c0_i32, %c0_i32_0 : i32, i32
  }
  func.func @transform_6(%arg0: i32) -> (i32, i32) {
    %c0_i32 = arith.constant 0 : i32
    %c0_i32_0 = arith.constant 0 : i32
    %c0_i32_1 = arith.constant 0 : i32
    return %c0_i32, %c0_i32_0 : i32, i32
  }
  func.func @transform_7(%arg0: i32) -> (i32, i32) {
    %c0_i32 = arith.constant 0 : i32
    %c0_i32_0 = arith.constant 0 : i32
    %c0_i32_1 = arith.constant 0 : i32
    return %c0_i32, %c0_i32_0 : i32, i32
  }
  func.func @transform_8(%arg0: i32) -> (i32, i32) {
    %c0_i32 = arith.constant 0 : i32
    %c0_i32_0 = arith.constant 0 : i32
    %c0_i32_1 = arith.constant 0 : i32
    return %c0_i32, %c0_i32_0 : i32, i32
  }
  func.func @transform_9(%arg0: i32) -> (i32, i32) {
    %c0_i32 = arith.constant 0 : i32
    %c0_i32_0 = arith.constant 0 : i32
    %c0_i32_1 = arith.constant 0 : i32
    return %c0_i32, %c0_i32_0 : i32, i32
  }
  func.func @transform_10(%arg0: i32) -> (i32, i32) {
    %c0_i32 = arith.constant 0 : i32
    %c0_i32_0 = arith.constant 0 : i32
    %c0_i32_1 = arith.constant 0 : i32
    return %c0_i32, %c0_i32_0 : i32, i32
  }
  func.func @transform_11(%arg0: i32) -> (i32, i32) {
    %c0_i32 = arith.constant 0 : i32
    %c0_i32_0 = arith.constant 0 : i32
    return %arg0, %c0_i32 : i32, i32
  }
}

</mosaic_0001>

<llo_original>
// kernel: net_forward.1
$region0: #{net_forward.1}
  #allocation0 [shape = 'u32[]', space=smem, size = 0x4, offset = 0x4, fixed_abs, tag = 'smem constant byte address 0x4 - core index']
  #allocation1 [shape = 'u32[144,128]{1,0:T(1,128)}', space=vmem, size = 0x12000, scoped, tag = 'internal scratch']
  %s0 = inlined_call_operand.vmem [shape: bf16[256,128], index: 0, kind: input, shape index: {}]
  %s1 = inlined_call_operand.vmem [shape: bf16[128,64], index: 1, kind: input, shape index: {}]
  %s2 = inlined_call_operand.vmem [shape: f32[1,64], index: 2, kind: input, shape index: {}]
  %s3 = inlined_call_operand.vmem [shape: bf16[64,128], index: 3, kind: input, shape index: {}]
  %s4 = inlined_call_operand.vmem [shape: f32[1,128], index: 4, kind: input, shape index: {}]
  %s5 = inlined_call_operand.vmem [shape: bf16[128,256], index: 5, kind: input, shape index: {}]
  %s6 = inlined_call_operand.vmem [shape: f32[1,256], index: 6, kind: input, shape index: {}]
  %s7 = inlined_call_operand.hbm [shape: bf16[256,128], index: 7, kind: input, shape index: {}]
  %s8 = inlined_call_operand.vmem [shape: f32[1,128], index: 8, kind: input, shape index: {}]
  %s9 = inlined_call_operand.vmem [shape: bf16[128,128], index: 9, kind: input, shape index: {}]
  %s10 = inlined_call_operand.vmem [shape: f32[1,128], index: 10, kind: input, shape index: {}]
  %s11 = inlined_call_operand.vmem [shape: f32[256,128], index: 11, kind: output, shape index: {}]
  %s12 = sld [smem:[#allocation0]]
  $region58: #{net_forward.1} parent=0
    _
  %s14 = ssub.s32 1, %s12
  %s15 = scalar_select 0, %s14, %s12
  $region1: #{net_forward.1} parent=0
    #allocation2 [shape = 'u8[65536]{0}', space=vmem, size = 0x10000, scoped, tag = 'input window, operand 7, single buffered']
    #allocation3 [shape = 's32[1]{0}', space=sflag, size = 0x4, scoped, tag = 'scoped memory for net_forward.1']
    %16 = vsyncpa [#allocation3], 0
    // Predicated region
    $region2: #{net_forward.1} parent=1 // pred_check
      _
    $region3: #{net_forward.1} parent=1 // pred_check_branch
      %18 = sbr.rel (0) target = $region5
    $region4: #{net_forward.1} parent=1 // pred_region
      _
    $region5: #{net_forward.1} parent=1 // pred_fallthru
      _
    // Predicated region
    $region6: #{net_forward.1} parent=1 // pred_check
      _
    $region7: #{net_forward.1} parent=1 // pred_check_branch
      %20 = sbr.rel (0) target = $region9
    $region8: #{net_forward.1} parent=1 // pred_region
      _
    $region9: #{net_forward.1} parent=1 // pred_fallthru
      _
    // Predicated region
    $region10: #{net_forward.1} parent=1 // pred_check
      _
    $region11: #{net_forward.1} parent=1 // pred_check_branch
      %22 = sbr.rel (0) target = $region13
    $region12: #{net_forward.1} parent=1 // pred_region
      _
    $region13: #{net_forward.1} parent=1 // pred_fallthru
      _
    // Predicated region
    $region14: #{net_forward.1} parent=1 // pred_check
      _
    $region15: #{net_forward.1} parent=1 // pred_check_branch
      %24 = sbr.rel (0) target = $region17
    $region16: #{net_forward.1} parent=1 // pred_region
      _
    $region17: #{net_forward.1} parent=1 // pred_fallthru
      _
    // Predicated region
    $region18: #{net_forward.1} parent=1 // pred_check
      _
    $region19: #{net_forward.1} parent=1 // pred_check_branch
      %26 = sbr.rel (0) target = $region21
    $region20: #{net_forward.1} parent=1 // pred_region
      _
    $region21: #{net_forward.1} parent=1 // pred_fallthru
      _
    // Predicated region
    $region22: #{net_forward.1} parent=1 // pred_check
      _
    $region23: #{net_forward.1} parent=1 // pred_check_branch
      %28 = sbr.rel (0) target = $region25
    $region24: #{net_forward.1} parent=1 // pred_region
      _
    $region25: #{net_forward.1} parent=1 // pred_fallthru
      _
    // Predicated region
    $region26: #{net_forward.1} parent=1 // pred_check
      _
    $region27: #{net_forward.1} parent=1 // pred_check_branch
      %30 = sbr.rel (0) target = $region29
    $region28: #{net_forward.1} parent=1 // pred_region
      _
    $region29: #{net_forward.1} parent=1 // pred_fallthru
      _
    // Predicated region
    $region30: #{net_forward.1} parent=1 // pred_check
      _
    $region31: #{net_forward.1} parent=1 // pred_check_branch
      %32 = sbr.rel (0) target = $region33
    $region32: #{net_forward.1} parent=1 // pred_region
      %s34 = ssub.s32 2048, 2048
      %35 = vsyncadd [#allocation3], %s34
      %s36 = sshll.u32 [#allocation2], 4
      %s37 = int_to_ptr.vmem [resolvable:$true] %s36
      %42 = dma.hbm_to_vmem [thread:$0]  %s7, 2048, %s37, [#allocation3], 64, 64, 4
    $region33: #{net_forward.1} parent=1 // pred_fallthru
      _
    // Predicated region
    $region34: #{net_forward.1} parent=1 // pred_check
      _
    $region35: #{net_forward.1} parent=1 // pred_check_branch
      %44 = sbr.rel (0) target = $region37
    $region36: #{net_forward.1} parent=1 // pred_region
      _
    $region37: #{net_forward.1} parent=1 // pred_fallthru
      _
    // Predicated region
    $region38: #{net_forward.1} parent=1 // pred_check
      _
    $region39: #{net_forward.1} parent=1 // pred_check_branch
      %46 = sbr.rel (0) target = $region41
    $region40: #{net_forward.1} parent=1 // pred_region
      _
    $region41: #{net_forward.1} parent=1 // pred_fallthru
      _
    // Predicated region
    $region42: #{net_forward.1} parent=1 // pred_check
      _
    $region43: #{net_forward.1} parent=1 // pred_check_branch
      %48 = sbr.rel (0) target = $region45
    $region44: #{net_forward.1} parent=1 // pred_region
      _
    $region45: #{net_forward.1} parent=1 // pred_fallthru
      _
    // Predicated region
    $region46: #{net_forward.1} parent=1 // pred_check
      _
    $region47: #{net_forward.1} parent=1 // pred_check_branch
      %50 = sbr.rel (0) target = $region49
    $region48: #{net_forward.1} parent=1 // pred_region
      %51 = dma.done [#allocation3], 2048
    $region49: #{net_forward.1} parent=1 // pred_fallthru
      _
    %v53 = vld [vmem:[%s0] sm:$0xf]
    %v54 = vld [vmem:[%s0 + $0x4] sm:$0xf]
    %v55 = vld [vmem:[%s0 + $0x8] sm:$0xf]
    %v56 = vld [vmem:[%s0 + $0xc] sm:$0xf]
    %v57 = vld [vmem:[%s0 + $0x10] sm:$0xf]
    %v58 = vld [vmem:[%s0 + $0x14] sm:$0xf]
    %v59 = vld [vmem:[%s0 + $0x18] sm:$0xf]
    %v60 = vld [vmem:[%s0 + $0x1c] sm:$0xf]
    %v61 = vld [vmem:[%s0 + $0x20] sm:$0xf]
    %v62 = vld [vmem:[%s0 + $0x24] sm:$0xf]
    %v63 = vld [vmem:[%s0 + $0x28] sm:$0xf]
    %v64 = vld [vmem:[%s0 + $0x2c] sm:$0xf]
    %v65 = vld [vmem:[%s0 + $0x30] sm:$0xf]
    %v66 = vld [vmem:[%s0 + $0x34] sm:$0xf]
    %v67 = vld [vmem:[%s0 + $0x38] sm:$0xf]
    %v68 = vld [vmem:[%s0 + $0x3c] sm:$0xf]
    %v69 = vld [vmem:[%s0 + $0x40] sm:$0xf]
    %v70 = vld [vmem:[%s0 + $0x44] sm:$0xf]
    %v71 = vld [vmem:[%s0 + $0x48] sm:$0xf]
    %v72 = vld [vmem:[%s0 + $0x4c] sm:$0xf]
    %v73 = vld [vmem:[%s0 + $0x50] sm:$0xf]
    %v74 = vld [vmem:[%s0 + $0x54] sm:$0xf]
    %v75 = vld [vmem:[%s0 + $0x58] sm:$0xf]
    %v76 = vld [vmem:[%s0 + $0x5c] sm:$0xf]
    %v77 = vld [vmem:[%s0 + $0x60] sm:$0xf]
    %v78 = vld [vmem:[%s0 + $0x64] sm:$0xf]
    %v79 = vld [vmem:[%s0 + $0x68] sm:$0xf]
    %v80 = vld [vmem:[%s0 + $0x6c] sm:$0xf]
    %v81 = vld [vmem:[%s0 + $0x70] sm:$0xf]
    %v82 = vld [vmem:[%s0 + $0x74] sm:$0xf]
    %v83 = vld [vmem:[%s0 + $0x78] sm:$0xf]
    %v84 = vld [vmem:[%s0 + $0x7c] sm:$0xf]
    %v85 = vld [vmem:[%s1] sm:$0xf]
    %v86 = vld [vmem:[%s1 + $0x4] sm:$0xf]
    %v87 = vld [vmem:[%s1 + $0x8] sm:$0xf]
    %v88 = vld [vmem:[%s1 + $0xc] sm:$0xf]
    %v89 = vld [vmem:[%s1 + $0x10] sm:$0xf]
    %v90 = vld [vmem:[%s1 + $0x14] sm:$0xf]
    %v91 = vld [vmem:[%s1 + $0x18] sm:$0xf]
    %v92 = vld [vmem:[%s1 + $0x1c] sm:$0xf]
    %v93 = vld [vmem:[%s1 + $0x20] sm:$0xf]
    %v94 = vld [vmem:[%s1 + $0x24] sm:$0xf]
    %v95 = vld [vmem:[%s1 + $0x28] sm:$0xf]
    %v96 = vld [vmem:[%s1 + $0x2c] sm:$0xf]
    %v97 = vld [vmem:[%s1 + $0x30] sm:$0xf]
    %v98 = vld [vmem:[%s1 + $0x34] sm:$0xf]
    %v99 = vld [vmem:[%s1 + $0x38] sm:$0xf]
    %v100 = vld [vmem:[%s1 + $0x3c] sm:$0xf]
    %v101 = vld [vmem:[%s2] sm:$0x1]
    %v103 = vlaneseq
    %v104 = vshrl.u32 %v103, 7
    %v105 = vsub.s32 0, %v104
    %v106 = vrot.slane %v101, %v105
    %v140 = vunpack.c.l.b16 %v53
    %v141 = vunpack.c.l.b16 %v54
    %v142 = vunpack.c.l.b16 %v55
    %v143 = vunpack.c.l.b16 %v56
    %v144 = vunpack.c.l.b16 %v57
    %v145 = vunpack.c.l.b16 %v58
    %v146 = vunpack.c.l.b16 %v59
    %v147 = vunpack.c.l.b16 %v60
    %v148 = vunpack.c.l.b16 %v61
    %v149 = vunpack.c.l.b16 %v62
    %v150 = vunpack.c.l.b16 %v63
    %v151 = vunpack.c.l.b16 %v64
    %v152 = vunpack.c.l.b16 %v65
    %v153 = vunpack.c.l.b16 %v66
    %v154 = vunpack.c.l.b16 %v67
    %v155 = vunpack.c.l.b16 %v68
    %v156 = vunpack.c.l.b16 %v69
    %v157 = vunpack.c.l.b16 %v70
    %v158 = vunpack.c.l.b16 %v71
    %v159 = vunpack.c.l.b16 %v72
    %v160 = vunpack.c.l.b16 %v73
    %v161 = vunpack.c.l.b16 %v74
    %v162 = vunpack.c.l.b16 %v75
    %v163 = vunpack.c.l.b16 %v76
    %v164 = vunpack.c.l.b16 %v77
    %v165 = vunpack.c.l.b16 %v78
    %v166 = vunpack.c.l.b16 %v79
    %v167 = vunpack.c.l.b16 %v80
    %v168 = vunpack.c.l.b16 %v81
    %v169 = vunpack.c.l.b16 %v82
    %v170 = vunpack.c.l.b16 %v83
    %v171 = vunpack.c.l.b16 %v84
    %v172 = vpack.c.b16 %v141, %v140
    %v173 = vpack.c.b16 %v143, %v142
    %v174 = vpack.c.b16 %v145, %v144
    %v175 = vpack.c.b16 %v147, %v146
    %v176 = vpack.c.b16 %v149, %v148
    %v177 = vpack.c.b16 %v151, %v150
    %v178 = vpack.c.b16 %v153, %v152
    %v179 = vpack.c.b16 %v155, %v154
    %v180 = vpack.c.b16 %v157, %v156
    %v181 = vpack.c.b16 %v159, %v158
    %v182 = vpack.c.b16 %v161, %v160
    %v183 = vpack.c.b16 %v163, %v162
    %v184 = vpack.c.b16 %v165, %v164
    %v185 = vpack.c.b16 %v167, %v166
    %v186 = vpack.c.b16 %v169, %v168
    %v187 = vpack.c.b16 %v171, %v170
    %v220 = vunpack.c.l.b16 %v85
    %v221 = vunpack.c.l.b16 %v86
    %v222 = vunpack.c.l.b16 %v87
    %v223 = vunpack.c.l.b16 %v88
    %v224 = vunpack.c.l.b16 %v89
    %v225 = vunpack.c.l.b16 %v90
    %v226 = vunpack.c.l.b16 %v91
    %v227 = vunpack.c.l.b16 %v92
    %v228 = vunpack.c.l.b16 %v93
    %v229 = vunpack.c.l.b16 %v94
    %v230 = vunpack.c.l.b16 %v95
    %v231 = vunpack.c.l.b16 %v96
    %v232 = vunpack.c.l.b16 %v97
    %v233 = vunpack.c.l.b16 %v98
    %v234 = vunpack.c.l.b16 %v99
    %v235 = vunpack.c.l.b16 %v100
    %v236 = vpack.c.b16 %v221, %v220
    %v237 = vpack.c.b16 %v223, %v222
    %v238 = vpack.c.b16 %v225, %v224
    %v239 = vpack.c.b16 %v227, %v226
    %v240 = vpack.c.b16 %v229, %v228
    %v241 = vpack.c.b16 %v231, %v230
    %v242 = vpack.c.b16 %v233, %v232
    %v243 = vpack.c.b16 %v235, %v234
    %252 = vmatprep.subr.bf16.mxu0 0
    %253 = vmatpush1.bf16.msra.mxu0 %v243
    %254 = vmatprep.subr.bf16.mxu0 0
    %255 = vmatpush1.bf16.msra.mxu0 %v242
    %256 = vmatprep.subr.bf16.mxu0 0
    %257 = vmatpush1.bf16.msra.mxu0 %v241
    %258 = vmatprep.subr.bf16.mxu0 0
    %259 = vmatpush1.bf16.msra.mxu0 %v240
    %260 = vmatprep.subr.bf16.mxu0 0
    %261 = vmatpush1.bf16.msra.mxu0 %v239
    %262 = vmatprep.subr.bf16.mxu0 0
    %263 = vmatpush1.bf16.msra.mxu0 %v238
    %264 = vmatprep.subr.bf16.mxu0 0
    %265 = vmatpush1.bf16.msra.mxu0 %v237
    %266 = vmatprep.subr.bf16.mxu0 0
    %267 = vmatpush1.bf16.msra.mxu0 %v236
    %268 = vmatprep.subr.bf16.mxu0 0
    %269 = vmatpush2.bf16.msra.mxu0 0
    %270 = vmatprep.subr.bf16.mxu0 0
    %271 = vmatpush2.bf16.msra.mxu0 0
    %272 = vmatprep.subr.bf16.mxu0 0
    %273 = vmatpush2.bf16.msra.mxu0 0
    %274 = vmatprep.subr.bf16.mxu0 0
    %275 = vmatpush2.bf16.msra.mxu0 0
    %276 = vmatprep.subr.bf16.mxu0 0
    %277 = vmatpush2.bf16.msra.mxu0 0
    %278 = vmatprep.subr.bf16.mxu0 0
    %279 = vmatpush2.bf16.msra.mxu0 0
    %280 = vmatprep.subr.bf16.mxu0 0
    %281 = vmatpush2.bf16.msra.mxu0 0
    %282 = vmatprep.subr.bf16.mxu0 0
    %283 = vmatpush2.bf16.msra.mxu0 0
    %284 = vmatprep.mubr.bf16.mxu0 0
    %285 = vmatmul.mubr.bf16.gmra.mxu0 %v172
    %v286 = vpop.f32.mrf.mxu0
    %v287 = vadd.f32 %v106, %v286
    %v288 = vpop.f32.mrf.mxu0
    %v289 = vpop.f32.mrf.mxu0
    %v290 = vadd.f32 %v106, %v289
    %v291 = vpop.f32.mrf.mxu0
    %292 = vmatprep.mubr.bf16.mxu0 0
    %293 = vmatmul.mubr.bf16.gmra.mxu0 %v173
    %v294 = vpop.f32.mrf.mxu0
    %v295 = vadd.f32 %v106, %v294
    %v296 = vpop.f32.mrf.mxu0
    %v297 = vpop.f32.mrf.mxu0
    %v298 = vadd.f32 %v106, %v297
    %v299 = vpop.f32.mrf.mxu0
    %300 = vmatprep.mubr.bf16.mxu0 0
    %301 = vmatmul.mubr.bf16.gmra.mxu0 %v174
    %v302 = vpop.f32.mrf.mxu0
    %v303 = vadd.f32 %v106, %v302
    %v304 = vpop.f32.mrf.mxu0
    %v305 = vpop.f32.mrf.mxu0
    %v306 = vadd.f32 %v106, %v305
    %v307 = vpop.f32.mrf.mxu0
    %308 = vmatprep.mubr.bf16.mxu0 0
    %309 = vmatmul.mubr.bf16.gmra.mxu0 %v175
    %v310 = vpop.f32.mrf.mxu0
    %v311 = vadd.f32 %v106, %v310
    %v312 = vpop.f32.mrf.mxu0
    %v313 = vpop.f32.mrf.mxu0
    %v314 = vadd.f32 %v106, %v313
    %v315 = vpop.f32.mrf.mxu0
    %316 = vmatprep.mubr.bf16.mxu0 0
    %317 = vmatmul.mubr.bf16.gmra.mxu0 %v176
    %v318 = vpop.f32.mrf.mxu0
    %v319 = vadd.f32 %v106, %v318
    %v320 = vpop.f32.mrf.mxu0
    %v321 = vpop.f32.mrf.mxu0
    %v322 = vadd.f32 %v106, %v321
    %v323 = vpop.f32.mrf.mxu0
    %324 = vmatprep.mubr.bf16.mxu0 0
    %325 = vmatmul.mubr.bf16.gmra.mxu0 %v177
    %v326 = vpop.f32.mrf.mxu0
    %v327 = vadd.f32 %v106, %v326
    %v328 = vpop.f32.mrf.mxu0
    %v329 = vpop.f32.mrf.mxu0
    %v330 = vadd.f32 %v106, %v329
    %v331 = vpop.f32.mrf.mxu0
    %332 = vmatprep.mubr.bf16.mxu0 0
    %333 = vmatmul.mubr.bf16.gmra.mxu0 %v178
    %v334 = vpop.f32.mrf.mxu0
    %v335 = vadd.f32 %v106, %v334
    %v336 = vpop.f32.mrf.mxu0
    %v337 = vpop.f32.mrf.mxu0
    %v338 = vadd.f32 %v106, %v337
    %v339 = vpop.f32.mrf.mxu0
    %340 = vmatprep.mubr.bf16.mxu0 0
    %341 = vmatmul.mubr.bf16.gmra.mxu0 %v179
    %v342 = vpop.f32.mrf.mxu0
    %v343 = vadd.f32 %v106, %v342
    %v344 = vpop.f32.mrf.mxu0
    %v345 = vpop.f32.mrf.mxu0
    %v346 = vadd.f32 %v106, %v345
    %v347 = vpop.f32.mrf.mxu0
    %348 = vmatprep.mubr.bf16.mxu0 0
    %349 = vmatmul.mubr.bf16.gmra.mxu0 %v180
    %v350 = vpop.f32.mrf.mxu0
    %v351 = vadd.f32 %v106, %v350
    %v352 = vpop.f32.mrf.mxu0
    %v353 = vpop.f32.mrf.mxu0
    %v354 = vadd.f32 %v106, %v353
    %v355 = vpop.f32.mrf.mxu0
    %356 = vmatprep.mubr.bf16.mxu0 0
    %357 = vmatmul.mubr.bf16.gmra.mxu0 %v181
    %v358 = vpop.f32.mrf.mxu0
    %v359 = vadd.f32 %v106, %v358
    %v360 = vpop.f32.mrf.mxu0
    %v361 = vpop.f32.mrf.mxu0
    %v362 = vadd.f32 %v106, %v361
    %v363 = vpop.f32.mrf.mxu0
    %364 = vmatprep.mubr.bf16.mxu0 0
    %365 = vmatmul.mubr.bf16.gmra.mxu0 %v182
    %v366 = vpop.f32.mrf.mxu0
    %v367 = vadd.f32 %v106, %v366
    %v368 = vpop.f32.mrf.mxu0
    %v369 = vpop.f32.mrf.mxu0
    %v370 = vadd.f32 %v106, %v369
    %v371 = vpop.f32.mrf.mxu0
    %372 = vmatprep.mubr.bf16.mxu0 0
    %373 = vmatmul.mubr.bf16.gmra.mxu0 %v183
    %v374 = vpop.f32.mrf.mxu0
    %v375 = vadd.f32 %v106, %v374
    %v376 = vpop.f32.mrf.mxu0
    %v377 = vpop.f32.mrf.mxu0
    %v378 = vadd.f32 %v106, %v377
    %v379 = vpop.f32.mrf.mxu0
    %380 = vmatprep.mubr.bf16.mxu0 0
    %381 = vmatmul.mubr.bf16.gmra.mxu0 %v184
    %v382 = vpop.f32.mrf.mxu0
    %v383 = vadd.f32 %v106, %v382
    %v384 = vpop.f32.mrf.mxu0
    %v385 = vpop.f32.mrf.mxu0
    %v386 = vadd.f32 %v106, %v385
    %v387 = vpop.f32.mrf.mxu0
    %388 = vmatprep.mubr.bf16.mxu0 0
    %389 = vmatmul.mubr.bf16.gmra.mxu0 %v185
    %v390 = vpop.f32.mrf.mxu0
    %v391 = vadd.f32 %v106, %v390
    %v392 = vpop.f32.mrf.mxu0
    %v393 = vpop.f32.mrf.mxu0
    %v394 = vadd.f32 %v106, %v393
    %v395 = vpop.f32.mrf.mxu0
    %396 = vmatprep.mubr.bf16.mxu0 0
    %397 = vmatmul.mubr.bf16.gmra.mxu0 %v186
    %v398 = vpop.f32.mrf.mxu0
    %v399 = vadd.f32 %v106, %v398
    %v400 = vpop.f32.mrf.mxu0
    %v401 = vpop.f32.mrf.mxu0
    %v402 = vadd.f32 %v106, %v401
    %v403 = vpop.f32.mrf.mxu0
    %404 = vmatprep.mubr.bf16.mxu0 0
    %405 = vmatmul.mubr.bf16.gmra.mxu0 %v187
    %v406 = vpop.f32.mrf.mxu0
    %v407 = vadd.f32 %v106, %v406
    %v408 = vpop.f32.mrf.mxu0
    %v409 = vpop.f32.mrf.mxu0
    %v410 = vadd.f32 %v106, %v409
    %v411 = vpop.f32.mrf.mxu0
    %412 = vdwg.mxu0
    %v413 = vmax.f32 %v287, 0.0
    %v414 = vmax.f32 %v290, 0.0
    %v415 = vmax.f32 %v295, 0.0
    %v416 = vmax.f32 %v298, 0.0
    %v417 = vmax.f32 %v303, 0.0
    %v418 = vmax.f32 %v306, 0.0
    %v419 = vmax.f32 %v311, 0.0
    %v420 = vmax.f32 %v314, 0.0
    %v421 = vmax.f32 %v319, 0.0
    %v422 = vmax.f32 %v322, 0.0
    %v423 = vmax.f32 %v327, 0.0
    %v424 = vmax.f32 %v330, 0.0
    %v425 = vmax.f32 %v335, 0.0
    %v426 = vmax.f32 %v338, 0.0
    %v427 = vmax.f32 %v343, 0.0
    %v428 = vmax.f32 %v346, 0.0
    %v429 = vmax.f32 %v351, 0.0
    %v430 = vmax.f32 %v354, 0.0
    %v431 = vmax.f32 %v359, 0.0
    %v432 = vmax.f32 %v362, 0.0
    %v433 = vmax.f32 %v367, 0.0
    %v434 = vmax.f32 %v370, 0.0
    %v435 = vmax.f32 %v375, 0.0
    %v436 = vmax.f32 %v378, 0.0
    %v437 = vmax.f32 %v383, 0.0
    %v438 = vmax.f32 %v386, 0.0
    %v439 = vmax.f32 %v391, 0.0
    %v440 = vmax.f32 %v394, 0.0
    %v441 = vmax.f32 %v399, 0.0
    %v442 = vmax.f32 %v402, 0.0
    %v443 = vmax.f32 %v407, 0.0
    %v444 = vmax.f32 %v410, 0.0
    %v445 = vpack.c.bf16 %v414, %v413
    %v446 = vpack.c.bf16 %v416, %v415
    %v447 = vpack.c.bf16 %v418, %v417
    %v448 = vpack.c.bf16 %v420, %v419
    %v449 = vpack.c.bf16 %v422, %v421
    %v450 = vpack.c.bf16 %v424, %v423
    %v451 = vpack.c.bf16 %v426, %v425
    %v452 = vpack.c.bf16 %v428, %v427
    %v453 = vpack.c.bf16 %v430, %v429
    %v454 = vpack.c.bf16 %v432, %v431
    %v455 = vpack.c.bf16 %v434, %v433
    %v456 = vpack.c.bf16 %v436, %v435
    %v457 = vpack.c.bf16 %v438, %v437
    %v458 = vpack.c.bf16 %v440, %v439
    %v459 = vpack.c.bf16 %v442, %v441
    %v460 = vpack.c.bf16 %v444, %v443
    %v461 = vld [vmem:[%s3] sm:$0xf]
    %v462 = vld [vmem:[%s3 + $0x4] sm:$0xf]
    %v463 = vld [vmem:[%s3 + $0x8] sm:$0xf]
    %v464 = vld [vmem:[%s3 + $0xc] sm:$0xf]
    %v465 = vld [vmem:[%s3 + $0x10] sm:$0xf]
    %v466 = vld [vmem:[%s3 + $0x14] sm:$0xf]
    %v467 = vld [vmem:[%s3 + $0x18] sm:$0xf]
    %v468 = vld [vmem:[%s3 + $0x1c] sm:$0xf]
    %v469 = vld [vmem:[%s4] sm:$0x1]
    %v471 = vlaneseq
    %v472 = vshrl.u32 %v471, 7
    %v473 = vsub.s32 0, %v472
    %v474 = vrot.slane %v469, %v473
    %v484 = vunpack.c.l.b16 %v461
    %v485 = vunpack.c.l.b16 %v462
    %v486 = vunpack.c.l.b16 %v463
    %v487 = vunpack.c.l.b16 %v464
    %v488 = vunpack.c.l.b16 %v465
    %v489 = vunpack.c.l.b16 %v466
    %v490 = vunpack.c.l.b16 %v467
    %v491 = vunpack.c.l.b16 %v468
    %v492 = vpack.c.b16 %v485, %v484
    %v493 = vpack.c.b16 %v487, %v486
    %v494 = vpack.c.b16 %v489, %v488
    %v495 = vpack.c.b16 %v491, %v490
    %vm500 = vcmask 523264
    %v502 = vsel %vm500, %v445, 0
    %v505 = vsel %vm500, %v446, 0
    %v508 = vsel %vm500, %v447, 0
    %v511 = vsel %vm500, %v448, 0
    %v514 = vsel %vm500, %v449, 0
    %v517 = vsel %vm500, %v450, 0
    %v520 = vsel %vm500, %v451, 0
    %v523 = vsel %vm500, %v452, 0
    %v526 = vsel %vm500, %v453, 0
    %v529 = vsel %vm500, %v454, 0
    %v532 = vsel %vm500, %v455, 0
    %v535 = vsel %vm500, %v456, 0
    %v538 = vsel %vm500, %v457, 0
    %v541 = vsel %vm500, %v458, 0
    %v544 = vsel %vm500, %v459, 0
    %v547 = vsel %vm500, %v460, 0
    %549 = vmatprep.subr.bf16.mxu0 0
    %550 = vmatpush1.bf16.msra.mxu0 0
    %551 = vmatprep.subr.bf16.mxu0 0
    %552 = vmatpush1.bf16.msra.mxu0 0
    %553 = vmatprep.subr.bf16.mxu0 0
    %554 = vmatpush1.bf16.msra.mxu0 0
    %555 = vmatprep.subr.bf16.mxu0 0
    %556 = vmatpush1.bf16.msra.mxu0 0
    %557 = vmatprep.subr.bf16.mxu0 0
    %558 = vmatpush1.bf16.msra.mxu0 %v495
    %559 = vmatprep.subr.bf16.mxu0 0
    %560 = vmatpush1.bf16.msra.mxu0 %v494
    %561 = vmatprep.subr.bf16.mxu0 0
    %562 = vmatpush1.bf16.msra.mxu0 %v493
    %563 = vmatprep.subr.bf16.mxu0 0
    %564 = vmatpush1.bf16.msra.mxu0 %v492
    %565 = vmatprep.subr.bf16.mxu0 0
    %566 = vmatpush2.bf16.msra.mxu0 0
    %567 = vmatprep.subr.bf16.mxu0 0
    %568 = vmatpush2.bf16.msra.mxu0 0
    %569 = vmatprep.subr.bf16.mxu0 0
    %570 = vmatpush2.bf16.msra.mxu0 0
    %571 = vmatprep.subr.bf16.mxu0 0
    %572 = vmatpush2.bf16.msra.mxu0 0
    %573 = vmatprep.subr.bf16.mxu0 0
    %574 = vmatpush2.bf16.msra.mxu0 0
    %575 = vmatprep.subr.bf16.mxu0 0
    %576 = vmatpush2.bf16.msra.mxu0 0
    %577 = vmatprep.subr.bf16.mxu0 0
    %578 = vmatpush2.bf16.msra.mxu0 0
    %579 = vmatprep.subr.bf16.mxu0 0
    %580 = vmatpush2.bf16.msra.mxu0 0
    %581 = vmatprep.mubr.bf16.mxu0 0
    %582 = vmatmul.mubr.bf16.gmra.mxu0 %v502
    %v583 = vpop.f32.mrf.mxu0
    %v584 = vadd.f32 %v474, %v583
    %v585 = vpop.f32.mrf.mxu0
    %v586 = vpop.f32.mrf.mxu0
    %v587 = vadd.f32 %v474, %v586
    %v588 = vpop.f32.mrf.mxu0
    %589 = vmatprep.mubr.bf16.mxu0 0
    %590 = vmatmul.mubr.bf16.gmra.mxu0 %v505
    %v591 = vpop.f32.mrf.mxu0
    %v592 = vadd.f32 %v474, %v591
    %v593 = vpop.f32.mrf.mxu0
    %v594 = vpop.f32.mrf.mxu0
    %v595 = vadd.f32 %v474, %v594
    %v596 = vpop.f32.mrf.mxu0
    %597 = vmatprep.mubr.bf16.mxu0 0
    %598 = vmatmul.mubr.bf16.gmra.mxu0 %v508
    %v599 = vpop.f32.mrf.mxu0
    %v600 = vadd.f32 %v474, %v599
    %v601 = vpop.f32.mrf.mxu0
    %v602 = vpop.f32.mrf.mxu0
    %v603 = vadd.f32 %v474, %v602
    %v604 = vpop.f32.mrf.mxu0
    %605 = vmatprep.mubr.bf16.mxu0 0
    %606 = vmatmul.mubr.bf16.gmra.mxu0 %v511
    %v607 = vpop.f32.mrf.mxu0
    %v608 = vadd.f32 %v474, %v607
    %v609 = vpop.f32.mrf.mxu0
    %v610 = vpop.f32.mrf.mxu0
    %v611 = vadd.f32 %v474, %v610
    %v612 = vpop.f32.mrf.mxu0
    %613 = vmatprep.mubr.bf16.mxu0 0
    %614 = vmatmul.mubr.bf16.gmra.mxu0 %v514
    %v615 = vpop.f32.mrf.mxu0
    %v616 = vadd.f32 %v474, %v615
    %v617 = vpop.f32.mrf.mxu0
    %v618 = vpop.f32.mrf.mxu0
    %v619 = vadd.f32 %v474, %v618
    %v620 = vpop.f32.mrf.mxu0
    %621 = vmatprep.mubr.bf16.mxu0 0
    %622 = vmatmul.mubr.bf16.gmra.mxu0 %v517
    %v623 = vpop.f32.mrf.mxu0
    %v624 = vadd.f32 %v474, %v623
    %v625 = vpop.f32.mrf.mxu0
    %v626 = vpop.f32.mrf.mxu0
    %v627 = vadd.f32 %v474, %v626
    %v628 = vpop.f32.mrf.mxu0
    %629 = vmatprep.mubr.bf16.mxu0 0
    %630 = vmatmul.mubr.bf16.gmra.mxu0 %v520
    %v631 = vpop.f32.mrf.mxu0
    %v632 = vadd.f32 %v474, %v631
    %v633 = vpop.f32.mrf.mxu0
    %v634 = vpop.f32.mrf.mxu0
    %v635 = vadd.f32 %v474, %v634
    %v636 = vpop.f32.mrf.mxu0
    %637 = vmatprep.mubr.bf16.mxu0 0
    %638 = vmatmul.mubr.bf16.gmra.mxu0 %v523
    %v639 = vpop.f32.mrf.mxu0
    %v640 = vadd.f32 %v474, %v639
    %v641 = vpop.f32.mrf.mxu0
    %v642 = vpop.f32.mrf.mxu0
    %v643 = vadd.f32 %v474, %v642
    %v644 = vpop.f32.mrf.mxu0
    %645 = vmatprep.mubr.bf16.mxu0 0
    %646 = vmatmul.mubr.bf16.gmra.mxu0 %v526
    %v647 = vpop.f32.mrf.mxu0
    %v648 = vadd.f32 %v474, %v647
    %v649 = vpop.f32.mrf.mxu0
    %v650 = vpop.f32.mrf.mxu0
    %v651 = vadd.f32 %v474, %v650
    %v652 = vpop.f32.mrf.mxu0
    %653 = vmatprep.mubr.bf16.mxu0 0
    %654 = vmatmul.mubr.bf16.gmra.mxu0 %v529
    %v655 = vpop.f32.mrf.mxu0
    %v656 = vadd.f32 %v474, %v655
    %v657 = vpop.f32.mrf.mxu0
    %v658 = vpop.f32.mrf.mxu0
    %v659 = vadd.f32 %v474, %v658
    %v660 = vpop.f32.mrf.mxu0
    %661 = vmatprep.mubr.bf16.mxu0 0
    %662 = vmatmul.mubr.bf16.gmra.mxu0 %v532
    %v663 = vpop.f32.mrf.mxu0
    %v664 = vadd.f32 %v474, %v663
    %v665 = vpop.f32.mrf.mxu0
    %v666 = vpop.f32.mrf.mxu0
    %v667 = vadd.f32 %v474, %v666
    %v668 = vpop.f32.mrf.mxu0
    %669 = vmatprep.mubr.bf16.mxu0 0
    %670 = vmatmul.mubr.bf16.gmra.mxu0 %v535
    %v671 = vpop.f32.mrf.mxu0
    %v672 = vadd.f32 %v474, %v671
    %v673 = vpop.f32.mrf.mxu0
    %v674 = vpop.f32.mrf.mxu0
    %v675 = vadd.f32 %v474, %v674
    %v676 = vpop.f32.mrf.mxu0
    %677 = vmatprep.mubr.bf16.mxu0 0
    %678 = vmatmul.mubr.bf16.gmra.mxu0 %v538
    %v679 = vpop.f32.mrf.mxu0
    %v680 = vadd.f32 %v474, %v679
    %v681 = vpop.f32.mrf.mxu0
    %v682 = vpop.f32.mrf.mxu0
    %v683 = vadd.f32 %v474, %v682
    %v684 = vpop.f32.mrf.mxu0
    %685 = vmatprep.mubr.bf16.mxu0 0
    %686 = vmatmul.mubr.bf16.gmra.mxu0 %v541
    %v687 = vpop.f32.mrf.mxu0
    %v688 = vadd.f32 %v474, %v687
    %v689 = vpop.f32.mrf.mxu0
    %v690 = vpop.f32.mrf.mxu0
    %v691 = vadd.f32 %v474, %v690
    %v692 = vpop.f32.mrf.mxu0
    %693 = vmatprep.mubr.bf16.mxu0 0
    %694 = vmatmul.mubr.bf16.gmra.mxu0 %v544
    %v695 = vpop.f32.mrf.mxu0
    %v696 = vadd.f32 %v474, %v695
    %v697 = vpop.f32.mrf.mxu0
    %v698 = vpop.f32.mrf.mxu0
    %v699 = vadd.f32 %v474, %v698
    %v700 = vpop.f32.mrf.mxu0
    %701 = vmatprep.mubr.bf16.mxu0 0
    %702 = vmatmul.mubr.bf16.gmra.mxu0 %v547
    %v703 = vpop.f32.mrf.mxu0
    %v704 = vadd.f32 %v474, %v703
    %v705 = vpop.f32.mrf.mxu0
    %v706 = vpop.f32.mrf.mxu0
    %v707 = vadd.f32 %v474, %v706
    %v708 = vpop.f32.mrf.mxu0
    %709 = vdwg.mxu0
    %v710 = vmax.f32 %v584, 0.0
    %v711 = vmax.f32 %v587, 0.0
    %v712 = vmax.f32 %v592, 0.0
    %v713 = vmax.f32 %v595, 0.0
    %v714 = vmax.f32 %v600, 0.0
    %v715 = vmax.f32 %v603, 0.0
    %v716 = vmax.f32 %v608, 0.0
    %v717 = vmax.f32 %v611, 0.0
    %v718 = vmax.f32 %v616, 0.0
    %v719 = vmax.f32 %v619, 0.0
    %v720 = vmax.f32 %v624, 0.0
    %v721 = vmax.f32 %v627, 0.0
    %v722 = vmax.f32 %v632, 0.0
    %v723 = vmax.f32 %v635, 0.0
    %v724 = vmax.f32 %v640, 0.0
    %v725 = vmax.f32 %v643, 0.0
    %v726 = vmax.f32 %v648, 0.0
    %v727 = vmax.f32 %v651, 0.0
    %v728 = vmax.f32 %v656, 0.0
    %v729 = vmax.f32 %v659, 0.0
    %v730 = vmax.f32 %v664, 0.0
    %v731 = vmax.f32 %v667, 0.0
    %v732 = vmax.f32 %v672, 0.0
    %v733 = vmax.f32 %v675, 0.0
    %v734 = vmax.f32 %v680, 0.0
    %v735 = vmax.f32 %v683, 0.0
    %v736 = vmax.f32 %v688, 0.0
    %v737 = vmax.f32 %v691, 0.0
    %v738 = vmax.f32 %v696, 0.0
    %v739 = vmax.f32 %v699, 0.0
    %v740 = vmax.f32 %v704, 0.0
    %v741 = vmax.f32 %v707, 0.0
    %v742 = vpack.c.bf16 %v711, %v710
    %v743 = vpack.c.bf16 %v713, %v712
    %v744 = vpack.c.bf16 %v715, %v714
    %v745 = vpack.c.bf16 %v717, %v716
    %v746 = vpack.c.bf16 %v719, %v718
    %v747 = vpack.c.bf16 %v721, %v720
    %v748 = vpack.c.bf16 %v723, %v722
    %v749 = vpack.c.bf16 %v725, %v724
    %v750 = vpack.c.bf16 %v727, %v726
    %v751 = vpack.c.bf16 %v729, %v728
    %v752 = vpack.c.bf16 %v731, %v730
    %v753 = vpack.c.bf16 %v733, %v732
    %v754 = vpack.c.bf16 %v735, %v734
    %v755 = vpack.c.bf16 %v737, %v736
    %v756 = vpack.c.bf16 %v739, %v738
    %v757 = vpack.c.bf16 %v741, %v740
    %v758 = vld [vmem:[%s5] sm:$0xff]
    %v759 = vld [vmem:[%s5 + $0x8] sm:$0xff]
    %v760 = vld [vmem:[%s5 + $0x10] sm:$0xff]
    %v761 = vld [vmem:[%s5 + $0x18] sm:$0xff]
    %v762 = vld [vmem:[%s5 + $0x20] sm:$0xff]
    %v763 = vld [vmem:[%s5 + $0x28] sm:$0xff]
    %v764 = vld [vmem:[%s5 + $0x30] sm:$0xff]
    %v765 = vld [vmem:[%s5 + $0x38] sm:$0xff]
    %v766 = vld [vmem:[%s5 + $0x40] sm:$0xff]
    %v767 = vld [vmem:[%s5 + $0x48] sm:$0xff]
    %v768 = vld [vmem:[%s5 + $0x50] sm:$0xff]
    %v769 = vld [vmem:[%s5 + $0x58] sm:$0xff]
    %v770 = vld [vmem:[%s5 + $0x60] sm:$0xff]
    %v771 = vld [vmem:[%s5 + $0x68] sm:$0xff]
    %v772 = vld [vmem:[%s5 + $0x70] sm:$0xff]
    %v773 = vld [vmem:[%s5 + $0x78] sm:$0xff]
    %v774 = vld [vmem:[%s6] sm:$0x3]
    %v776 = vlaneseq
    %v777 = vshrl.u32 %v776, 7
    %v778 = vsub.s32 0, %v777
    %v779 = vrot.slane %v774, %v778
    %v780 = vlaneseq
    %v781 = vshrl.u32 %v780, 7
    %v782 = vsub.s32 1, %v781
    %v783 = vrot.slane %v774, %v782
    %v802 = vunpack.c.l.b16 %v758
    %v803 = vunpack.c.h.b16 %v758
    %v804 = vunpack.c.l.b16 %v759
    %v805 = vunpack.c.h.b16 %v759
    %v806 = vunpack.c.l.b16 %v760
    %v807 = vunpack.c.h.b16 %v760
    %v808 = vunpack.c.l.b16 %v761
    %v809 = vunpack.c.h.b16 %v761
    %v810 = vunpack.c.l.b16 %v762
    %v811 = vunpack.c.h.b16 %v762
    %v812 = vunpack.c.l.b16 %v763
    %v813 = vunpack.c.h.b16 %v763
    %v814 = vunpack.c.l.b16 %v764
    %v815 = vunpack.c.h.b16 %v764
    %v816 = vunpack.c.l.b16 %v765
    %v817 = vunpack.c.h.b16 %v765
    %v818 = vunpack.c.l.b16 %v766
    %v819 = vunpack.c.h.b16 %v766
    %v820 = vunpack.c.l.b16 %v767
    %v821 = vunpack.c.h.b16 %v767
    %v822 = vunpack.c.l.b16 %v768
    %v823 = vunpack.c.h.b16 %v768
    %v824 = vunpack.c.l.b16 %v769
    %v825 = vunpack.c.h.b16 %v769
    %v826 = vunpack.c.l.b16 %v770
    %v827 = vunpack.c.h.b16 %v770
    %v828 = vunpack.c.l.b16 %v771
    %v829 = vunpack.c.h.b16 %v771
    %v830 = vunpack.c.l.b16 %v772
    %v831 = vunpack.c.h.b16 %v772
    %v832 = vunpack.c.l.b16 %v773
    %v833 = vunpack.c.h.b16 %v773
    %v834 = vpack.c.b16 %v804, %v802
    %v835 = vpack.c.b16 %v805, %v803
    %v836 = vpack.c.b16 %v808, %v806
    %v837 = vpack.c.b16 %v809, %v807
    %v838 = vpack.c.b16 %v812, %v810
    %v839 = vpack.c.b16 %v813, %v811
    %v840 = vpack.c.b16 %v816, %v814
    %v841 = vpack.c.b16 %v817, %v815
    %v842 = vpack.c.b16 %v820, %v818
    %v843 = vpack.c.b16 %v821, %v819
    %v844 = vpack.c.b16 %v824, %v822
    %v845 = vpack.c.b16 %v825, %v823
    %v846 = vpack.c.b16 %v828, %v826
    %v847 = vpack.c.b16 %v829, %v827
    %v848 = vpack.c.b16 %v832, %v830
    %v849 = vpack.c.b16 %v833, %v831
    %866 = vmatprep.subr.bf16.mxu0 %v849
    %867 = vmatpush1.bf16.msra.mxu0 %v848
    %868 = vmatprep.subr.bf16.mxu0 %v847
    %869 = vmatpush1.bf16.msra.mxu0 %v846
    %870 = vmatprep.subr.bf16.mxu0 %v845
    %871 = vmatpush1.bf16.msra.mxu0 %v844
    %872 = vmatprep.subr.bf16.mxu0 %v843
    %873 = vmatpush1.bf16.msra.mxu0 %v842
    %874 = vmatprep.subr.bf16.mxu0 %v841
    %875 = vmatpush1.bf16.msra.mxu0 %v840
    %876 = vmatprep.subr.bf16.mxu0 %v839
    %877 = vmatpush1.bf16.msra.mxu0 %v838
    %878 = vmatprep.subr.bf16.mxu0 %v837
    %879 = vmatpush1.bf16.msra.mxu0 %v836
    %880 = vmatprep.subr.bf16.mxu0 %v835
    %881 = vmatpush1.bf16.msra.mxu0 %v834
    %882 = vmatprep.subr.bf16.mxu0 0
    %883 = vmatpush2.bf16.msra.mxu0 0
    %884 = vmatprep.subr.bf16.mxu0 0
    %885 = vmatpush2.bf16.msra.mxu0 0
    %886 = vmatprep.subr.bf16.mxu0 0
    %887 = vmatpush2.bf16.msra.mxu0 0
    %888 = vmatprep.subr.bf16.mxu0 0
    %889 = vmatpush2.bf16.msra.mxu0 0
    %890 = vmatprep.subr.bf16.mxu0 0
    %891 = vmatpush2.bf16.msra.mxu0 0
    %892 = vmatprep.subr.bf16.mxu0 0
    %893 = vmatpush2.bf16.msra.mxu0 0
    %894 = vmatprep.subr.bf16.mxu0 0
    %895 = vmatpush2.bf16.msra.mxu0 0
    %896 = vmatprep.subr.bf16.mxu0 0
    %897 = vmatpush2.bf16.msra.mxu0 0
    %898 = vmatprep.mubr.bf16.mxu0 0
    %899 = vmatmul.mubr.bf16.gmra.mxu0 %v742
    %v900 = vpop.f32.mrf.mxu0
    %v901 = vadd.f32 %v779, %v900
    %v902 = vpop.f32.mrf.mxu0
    %v903 = vadd.f32 %v783, %v902
    %v904 = vpop.f32.mrf.mxu0
    %v905 = vadd.f32 %v779, %v904
    %v906 = vpop.f32.mrf.mxu0
    %v907 = vadd.f32 %v783, %v906
    %908 = vmatprep.mubr.bf16.mxu0 0
    %909 = vmatmul.mubr.bf16.gmra.mxu0 %v743
    %v910 = vpop.f32.mrf.mxu0
    %v911 = vadd.f32 %v779, %v910
    %v912 = vpop.f32.mrf.mxu0
    %v913 = vadd.f32 %v783, %v912
    %v914 = vpop.f32.mrf.mxu0
    %v915 = vadd.f32 %v779, %v914
    %v916 = vpop.f32.mrf.mxu0
    %v917 = vadd.f32 %v783, %v916
    %918 = vmatprep.mubr.bf16.mxu0 0
    %919 = vmatmul.mubr.bf16.gmra.mxu0 %v744
    %v920 = vpop.f32.mrf.mxu0
    %v921 = vadd.f32 %v779, %v920
    %v922 = vpop.f32.mrf.mxu0
    %v923 = vadd.f32 %v783, %v922
    %v924 = vpop.f32.mrf.mxu0
    %v925 = vadd.f32 %v779, %v924
    %v926 = vpop.f32.mrf.mxu0
    %v927 = vadd.f32 %v783, %v926
    %928 = vmatprep.mubr.bf16.mxu0 0
    %929 = vmatmul.mubr.bf16.gmra.mxu0 %v745
    %v930 = vpop.f32.mrf.mxu0
    %v931 = vadd.f32 %v779, %v930
    %v932 = vpop.f32.mrf.mxu0
    %v933 = vadd.f32 %v783, %v932
    %v934 = vpop.f32.mrf.mxu0
    %v935 = vadd.f32 %v779, %v934
    %v936 = vpop.f32.mrf.mxu0
    %v937 = vadd.f32 %v783, %v936
    %938 = vmatprep.mubr.bf16.mxu0 0
    %939 = vmatmul.mubr.bf16.gmra.mxu0 %v746
    %v940 = vpop.f32.mrf.mxu0
    %v941 = vadd.f32 %v779, %v940
    %v942 = vpop.f32.mrf.mxu0
    %v943 = vadd.f32 %v783, %v942
    %v944 = vpop.f32.mrf.mxu0
    %v945 = vadd.f32 %v779, %v944
    %v946 = vpop.f32.mrf.mxu0
    %v947 = vadd.f32 %v783, %v946
    %948 = vmatprep.mubr.bf16.mxu0 0
    %949 = vmatmul.mubr.bf16.gmra.mxu0 %v747
    %v950 = vpop.f32.mrf.mxu0
    %v951 = vadd.f32 %v779, %v950
    %v952 = vpop.f32.mrf.mxu0
    %v953 = vadd.f32 %v783, %v952
    %v954 = vpop.f32.mrf.mxu0
    %v955 = vadd.f32 %v779, %v954
    %v956 = vpop.f32.mrf.mxu0
    %v957 = vadd.f32 %v783, %v956
    %958 = vmatprep.mubr.bf16.mxu0 0
    %959 = vmatmul.mubr.bf16.gmra.mxu0 %v748
    %v960 = vpop.f32.mrf.mxu0
    %v961 = vadd.f32 %v779, %v960
    %v962 = vpop.f32.mrf.mxu0
    %v963 = vadd.f32 %v783, %v962
    %v964 = vpop.f32.mrf.mxu0
    %v965 = vadd.f32 %v779, %v964
    %v966 = vpop.f32.mrf.mxu0
    %v967 = vadd.f32 %v783, %v966
    %968 = vmatprep.mubr.bf16.mxu0 0
    %969 = vmatmul.mubr.bf16.gmra.mxu0 %v749
    %v970 = vpop.f32.mrf.mxu0
    %v971 = vadd.f32 %v779, %v970
    %v972 = vpop.f32.mrf.mxu0
    %v973 = vadd.f32 %v783, %v972
    %v974 = vpop.f32.mrf.mxu0
    %v975 = vadd.f32 %v779, %v974
    %v976 = vpop.f32.mrf.mxu0
    %v977 = vadd.f32 %v783, %v976
    %978 = vmatprep.mubr.bf16.mxu0 0
    %979 = vmatmul.mubr.bf16.gmra.mxu0 %v750
    %v980 = vpop.f32.mrf.mxu0
    %v981 = vadd.f32 %v779, %v980
    %v982 = vpop.f32.mrf.mxu0
    %v983 = vadd.f32 %v783, %v982
    %v984 = vpop.f32.mrf.mxu0
    %v985 = vadd.f32 %v779, %v984
    %v986 = vpop.f32.mrf.mxu0
    %v987 = vadd.f32 %v783, %v986
    %988 = vmatprep.mubr.bf16.mxu0 0
    %989 = vmatmul.mubr.bf16.gmra.mxu0 %v751
    %v990 = vpop.f32.mrf.mxu0
    %v991 = vadd.f32 %v779, %v990
    %v992 = vpop.f32.mrf.mxu0
    %v993 = vadd.f32 %v783, %v992
    %v994 = vpop.f32.mrf.mxu0
    %v995 = vadd.f32 %v779, %v994
    %v996 = vpop.f32.mrf.mxu0
    %v997 = vadd.f32 %v783, %v996
    %998 = vmatprep.mubr.bf16.mxu0 0
    %999 = vmatmul.mubr.bf16.gmra.mxu0 %v752
    %v1000 = vpop.f32.mrf.mxu0
    %v1001 = vadd.f32 %v779, %v1000
    %v1002 = vpop.f32.mrf.mxu0
    %v1003 = vadd.f32 %v783, %v1002
    %v1004 = vpop.f32.mrf.mxu0
    %v1005 = vadd.f32 %v779, %v1004
    %v1006 = vpop.f32.mrf.mxu0
    %v1007 = vadd.f32 %v783, %v1006
    %1008 = vmatprep.mubr.bf16.mxu0 0
    %1009 = vmatmul.mubr.bf16.gmra.mxu0 %v753
    %v1010 = vpop.f32.mrf.mxu0
    %v1011 = vadd.f32 %v779, %v1010
    %v1012 = vpop.f32.mrf.mxu0
    %v1013 = vadd.f32 %v783, %v1012
    %v1014 = vpop.f32.mrf.mxu0
    %v1015 = vadd.f32 %v779, %v1014
    %v1016 = vpop.f32.mrf.mxu0
    %v1017 = vadd.f32 %v783, %v1016
    %1018 = vmatprep.mubr.bf16.mxu0 0
    %1019 = vmatmul.mubr.bf16.gmra.mxu0 %v754
    %v1020 = vpop.f32.mrf.mxu0
    %v1021 = vadd.f32 %v779, %v1020
    %v1022 = vpop.f32.mrf.mxu0
    %v1023 = vadd.f32 %v783, %v1022
    %v1024 = vpop.f32.mrf.mxu0
    %v1025 = vadd.f32 %v779, %v1024
    %v1026 = vpop.f32.mrf.mxu0
    %v1027 = vadd.f32 %v783, %v1026
    %1028 = vmatprep.mubr.bf16.mxu0 0
    %1029 = vmatmul.mubr.bf16.gmra.mxu0 %v755
    %v1030 = vpop.f32.mrf.mxu0
    %v1031 = vadd.f32 %v779, %v1030
    %v1032 = vpop.f32.mrf.mxu0
    %v1033 = vadd.f32 %v783, %v1032
    %v1034 = vpop.f32.mrf.mxu0
    %v1035 = vadd.f32 %v779, %v1034
    %v1036 = vpop.f32.mrf.mxu0
    %v1037 = vadd.f32 %v783, %v1036
    %1038 = vmatprep.mubr.bf16.mxu0 0
    %1039 = vmatmul.mubr.bf16.gmra.mxu0 %v756
    %v1040 = vpop.f32.mrf.mxu0
    %v1041 = vadd.f32 %v779, %v1040
    %v1042 = vpop.f32.mrf.mxu0
    %v1043 = vadd.f32 %v783, %v1042
    %v1044 = vpop.f32.mrf.mxu0
    %v1045 = vadd.f32 %v779, %v1044
    %v1046 = vpop.f32.mrf.mxu0
    %v1047 = vadd.f32 %v783, %v1046
    %1048 = vmatprep.mubr.bf16.mxu0 0
    %1049 = vmatmul.mubr.bf16.gmra.mxu0 %v757
    %v1050 = vpop.f32.mrf.mxu0
    %v1051 = vadd.f32 %v779, %v1050
    %v1052 = vpop.f32.mrf.mxu0
    %v1053 = vadd.f32 %v783, %v1052
    %v1054 = vpop.f32.mrf.mxu0
    %v1055 = vadd.f32 %v779, %v1054
    %v1056 = vpop.f32.mrf.mxu0
    %v1057 = vadd.f32 %v783, %v1056
    %1058 = vdwg.mxu0
    %v1059 = vmax.f32 %v901, 0.0
    %v1060 = vmax.f32 %v903, 0.0
    %v1061 = vmax.f32 %v905, 0.0
    %v1062 = vmax.f32 %v907, 0.0
    %v1063 = vmax.f32 %v911, 0.0
    %v1064 = vmax.f32 %v913, 0.0
    %v1065 = vmax.f32 %v915, 0.0
    %v1066 = vmax.f32 %v917, 0.0
    %v1067 = vmax.f32 %v921, 0.0
    %v1068 = vmax.f32 %v923, 0.0
    %v1069 = vmax.f32 %v925, 0.0
    %v1070 = vmax.f32 %v927, 0.0
    %v1071 = vmax.f32 %v931, 0.0
    %v1072 = vmax.f32 %v933, 0.0
    %v1073 = vmax.f32 %v935, 0.0
    %v1074 = vmax.f32 %v937, 0.0
    %v1075 = vmax.f32 %v941, 0.0
    %v1076 = vmax.f32 %v943, 0.0
    %v1077 = vmax.f32 %v945, 0.0
    %v1078 = vmax.f32 %v947, 0.0
    %v1079 = vmax.f32 %v951, 0.0
    %v1080 = vmax.f32 %v953, 0.0
    %v1081 = vmax.f32 %v955, 0.0
    %v1082 = vmax.f32 %v957, 0.0
    %v1083 = vmax.f32 %v961, 0.0
    %v1084 = vmax.f32 %v963, 0.0
    %v1085 = vmax.f32 %v965, 0.0
    %v1086 = vmax.f32 %v967, 0.0
    %v1087 = vmax.f32 %v971, 0.0
    %v1088 = vmax.f32 %v973, 0.0
    %v1089 = vmax.f32 %v975, 0.0
    %v1090 = vmax.f32 %v977, 0.0
    %v1091 = vmax.f32 %v981, 0.0
    %v1092 = vmax.f32 %v983, 0.0
    %v1093 = vmax.f32 %v985, 0.0
    %v1094 = vmax.f32 %v987, 0.0
    %v1095 = vmax.f32 %v991, 0.0
    %v1096 = vmax.f32 %v993, 0.0
    %v1097 = vmax.f32 %v995, 0.0
    %v1098 = vmax.f32 %v997, 0.0
    %v1099 = vmax.f32 %v1001, 0.0
    %v1100 = vmax.f32 %v1003, 0.0
    %v1101 = vmax.f32 %v1005, 0.0
    %v1102 = vmax.f32 %v1007, 0.0
    %v1103 = vmax.f32 %v1011, 0.0
    %v1104 = vmax.f32 %v1013, 0.0
    %v1105 = vmax.f32 %v1015, 0.0
    %v1106 = vmax.f32 %v1017, 0.0
    %v1107 = vmax.f32 %v1021, 0.0
    %v1108 = vmax.f32 %v1023, 0.0
    %v1109 = vmax.f32 %v1025, 0.0
    %v1110 = vmax.f32 %v1027, 0.0
    %v1111 = vmax.f32 %v1031, 0.0
    %v1112 = vmax.f32 %v1033, 0.0
    %v1113 = vmax.f32 %v1035, 0.0
    %v1114 = vmax.f32 %v1037, 0.0
    %v1115 = vmax.f32 %v1041, 0.0
    %v1116 = vmax.f32 %v1043, 0.0
    %v1117 = vmax.f32 %v1045, 0.0
    %v1118 = vmax.f32 %v1047, 0.0
    %v1119 = vmax.f32 %v1051, 0.0
    %v1120 = vmax.f32 %v1053, 0.0
    %v1121 = vmax.f32 %v1055, 0.0
    %v1122 = vmax.f32 %v1057, 0.0
    %v1123 = vpack.c.bf16 %v1061, %v1059
    %v1124 = vpack.c.bf16 %v1062, %v1060
    %v1125 = vpack.c.bf16 %v1065, %v1063
    %v1126 = vpack.c.bf16 %v1066, %v1064
    %v1127 = vpack.c.bf16 %v1069, %v1067
    %v1128 = vpack.c.bf16 %v1070, %v1068
    %v1129 = vpack.c.bf16 %v1073, %v1071
    %v1130 = vpack.c.bf16 %v1074, %v1072
    %v1131 = vpack.c.bf16 %v1077, %v1075
    %v1132 = vpack.c.bf16 %v1078, %v1076
    %v1133 = vpack.c.bf16 %v1081, %v1079
    %v1134 = vpack.c.bf16 %v1082, %v1080
    %v1135 = vpack.c.bf16 %v1085, %v1083
    %v1136 = vpack.c.bf16 %v1086, %v1084
    %v1137 = vpack.c.bf16 %v1089, %v1087
    %v1138 = vpack.c.bf16 %v1090, %v1088
    %v1139 = vpack.c.bf16 %v1093, %v1091
    %v1140 = vpack.c.bf16 %v1094, %v1092
    %v1141 = vpack.c.bf16 %v1097, %v1095
    %v1142 = vpack.c.bf16 %v1098, %v1096
    %v1143 = vpack.c.bf16 %v1101, %v1099
    %v1144 = vpack.c.bf16 %v1102, %v1100
    %v1145 = vpack.c.bf16 %v1105, %v1103
    %v1146 = vpack.c.bf16 %v1106, %v1104
    %v1147 = vpack.c.bf16 %v1109, %v1107
    %v1148 = vpack.c.bf16 %v1110, %v1108
    %v1149 = vpack.c.bf16 %v1113, %v1111
    %v1150 = vpack.c.bf16 %v1114, %v1112
    %v1151 = vpack.c.bf16 %v1117, %v1115
    %v1152 = vpack.c.bf16 %v1118, %v1116
    %v1153 = vpack.c.bf16 %v1121, %v1119
    %v1154 = vpack.c.bf16 %v1122, %v1120
    %v1155 = vld [vmem:[#allocation2] sm:$0xf]
    %v1156 = vld [vmem:[#allocation2 + $0x4] sm:$0xf]
    %v1157 = vld [vmem:[#allocation2 + $0x8] sm:$0xf]
    %v1158 = vld [vmem:[#allocation2 + $0xc] sm:$0xf]
    %v1159 = vld [vmem:[#allocation2 + $0x10] sm:$0xf]
    %v1160 = vld [vmem:[#allocation2 + $0x14] sm:$0xf]
    %v1161 = vld [vmem:[#allocation2 + $0x18] sm:$0xf]
    %v1162 = vld [vmem:[#allocation2 + $0x1c] sm:$0xf]
    %v1163 = vld [vmem:[#allocation2 + $0x20] sm:$0xf]
    %v1164 = vld [vmem:[#allocation2 + $0x24] sm:$0xf]
    %v1165 = vld [vmem:[#allocation2 + $0x28] sm:$0xf]
    %v1166 = vld [vmem:[#allocation2 + $0x2c] sm:$0xf]
    %v1167 = vld [vmem:[#allocation2 + $0x30] sm:$0xf]
    %v1168 = vld [vmem:[#allocation2 + $0x34] sm:$0xf]
    %v1169 = vld [vmem:[#allocation2 + $0x38] sm:$0xf]
    %v1170 = vld [vmem:[#allocation2 + $0x3c] sm:$0xf]
    %v1171 = vld [vmem:[#allocation2 + $0x40] sm:$0xf]
    %v1172 = vld [vmem:[#allocation2 + $0x44] sm:$0xf]
    %v1173 = vld [vmem:[#allocation2 + $0x48] sm:$0xf]
    %v1174 = vld [vmem:[#allocation2 + $0x4c] sm:$0xf]
    %v1175 = vld [vmem:[#allocation2 + $0x50] sm:$0xf]
    %v1176 = vld [vmem:[#allocation2 + $0x54] sm:$0xf]
    %v1177 = vld [vmem:[#allocation2 + $0x58] sm:$0xf]
    %v1178 = vld [vmem:[#allocation2 + $0x5c] sm:$0xf]
    %v1179 = vld [vmem:[#allocation2 + $0x60] sm:$0xf]
    %v1180 = vld [vmem:[#allocation2 + $0x64] sm:$0xf]
    %v1181 = vld [vmem:[#allocation2 + $0x68] sm:$0xf]
    %v1182 = vld [vmem:[#allocation2 + $0x6c] sm:$0xf]
    %v1183 = vld [vmem:[#allocation2 + $0x70] sm:$0xf]
    %v1184 = vld [vmem:[#allocation2 + $0x74] sm:$0xf]
    %v1185 = vld [vmem:[#allocation2 + $0x78] sm:$0xf]
    %v1186 = vld [vmem:[#allocation2 + $0x7c] sm:$0xf]
    %v1187 = vld [vmem:[%s8] sm:$0x1]
    %v1189 = vlaneseq
    %v1190 = vshrl.u32 %v1189, 7
    %v1191 = vsub.s32 0, %v1190
    %v1192 = vrot.slane %v1187, %v1191
    %v1226 = vunpack.c.l.b16 %v1155
    %v1227 = vunpack.c.l.b16 %v1156
    %v1228 = vunpack.c.l.b16 %v1157
    %v1229 = vunpack.c.l.b16 %v1158
    %v1230 = vunpack.c.l.b16 %v1159
    %v1231 = vunpack.c.l.b16 %v1160
    %v1232 = vunpack.c.l.b16 %v1161
    %v1233 = vunpack.c.l.b16 %v1162
    %v1234 = vunpack.c.l.b16 %v1163
    %v1235 = vunpack.c.l.b16 %v1164
    %v1236 = vunpack.c.l.b16 %v1165
    %v1237 = vunpack.c.l.b16 %v1166
    %v1238 = vunpack.c.l.b16 %v1167
    %v1239 = vunpack.c.l.b16 %v1168
    %v1240 = vunpack.c.l.b16 %v1169
    %v1241 = vunpack.c.l.b16 %v1170
    %v1242 = vunpack.c.l.b16 %v1171
    %v1243 = vunpack.c.l.b16 %v1172
    %v1244 = vunpack.c.l.b16 %v1173
    %v1245 = vunpack.c.l.b16 %v1174
    %v1246 = vunpack.c.l.b16 %v1175
    %v1247 = vunpack.c.l.b16 %v1176
    %v1248 = vunpack.c.l.b16 %v1177
    %v1249 = vunpack.c.l.b16 %v1178
    %v1250 = vunpack.c.l.b16 %v1179
    %v1251 = vunpack.c.l.b16 %v1180
    %v1252 = vunpack.c.l.b16 %v1181
    %v1253 = vunpack.c.l.b16 %v1182
    %v1254 = vunpack.c.l.b16 %v1183
    %v1255 = vunpack.c.l.b16 %v1184
    %v1256 = vunpack.c.l.b16 %v1185
    %v1257 = vunpack.c.l.b16 %v1186
    %v1258 = vpack.c.b16 %v1227, %v1226
    %v1259 = vpack.c.b16 %v1229, %v1228
    %v1260 = vpack.c.b16 %v1231, %v1230
    %v1261 = vpack.c.b16 %v1233, %v1232
    %v1262 = vpack.c.b16 %v1235, %v1234
    %v1263 = vpack.c.b16 %v1237, %v1236
    %v1264 = vpack.c.b16 %v1239, %v1238
    %v1265 = vpack.c.b16 %v1241, %v1240
    %v1266 = vpack.c.b16 %v1243, %v1242
    %v1267 = vpack.c.b16 %v1245, %v1244
    %v1268 = vpack.c.b16 %v1247, %v1246
    %v1269 = vpack.c.b16 %v1249, %v1248
    %v1270 = vpack.c.b16 %v1251, %v1250
    %v1271 = vpack.c.b16 %v1253, %v1252
    %v1272 = vpack.c.b16 %v1255, %v1254
    %v1273 = vpack.c.b16 %v1257, %v1256
    %1290 = vmatprep.subr.bf16.mxu0 0
    %1291 = vmatpush1.bf16.msra.mxu0 %v1265
    %1292 = vmatprep.subr.bf16.mxu0 0
    %1293 = vmatpush1.bf16.msra.mxu0 %v1264
    %1294 = vmatprep.subr.bf16.mxu0 0
    %1295 = vmatpush1.bf16.msra.mxu0 %v1263
    %1296 = vmatprep.subr.bf16.mxu0 0
    %1297 = vmatpush1.bf16.msra.mxu0 %v1262
    %1298 = vmatprep.subr.bf16.mxu0 0
    %1299 = vmatpush1.bf16.msra.mxu0 %v1261
    %1300 = vmatprep.subr.bf16.mxu0 0
    %1301 = vmatpush1.bf16.msra.mxu0 %v1260
    %1302 = vmatprep.subr.bf16.mxu0 0
    %1303 = vmatpush1.bf16.msra.mxu0 %v1259
    %1304 = vmatprep.subr.bf16.mxu0 0
    %1305 = vmatpush1.bf16.msra.mxu0 %v1258
    %1306 = vmatprep.subr.bf16.mxu0 0
    %1307 = vmatpush2.bf16.msra.mxu0 %v1273
    %1308 = vmatprep.subr.bf16.mxu0 0
    %1309 = vmatpush2.bf16.msra.mxu0 %v1272
    %1310 = vmatprep.subr.bf16.mxu0 0
    %1311 = vmatpush2.bf16.msra.mxu0 %v1271
    %1312 = vmatprep.subr.bf16.mxu0 0
    %1313 = vmatpush2.bf16.msra.mxu0 %v1270
    %1314 = vmatprep.subr.bf16.mxu0 0
    %1315 = vmatpush2.bf16.msra.mxu0 %v1269
    %1316 = vmatprep.subr.bf16.mxu0 0
    %1317 = vmatpush2.bf16.msra.mxu0 %v1268
    %1318 = vmatprep.subr.bf16.mxu0 0
    %1319 = vmatpush2.bf16.msra.mxu0 %v1267
    %1320 = vmatprep.subr.bf16.mxu0 0
    %1321 = vmatpush2.bf16.msra.mxu0 %v1266
    %1322 = vmatprep.mubr.bf16.mxu0 %v1124
    %1323 = vmatmul.mubr.bf16.gmra.mxu0 %v1123
    %v1324 = vpop.f32.mrf.mxu0
    %v1325 = vadd.f32 %v1192, %v1324
    %v1326 = vpop.f32.mrf.mxu0
    %v1327 = vpop.f32.mrf.mxu0
    %v1328 = vadd.f32 %v1192, %v1327
    %v1329 = vpop.f32.mrf.mxu0
    %1330 = vmatprep.mubr.bf16.mxu0 %v1126
    %1331 = vmatmul.mubr.bf16.gmra.mxu0 %v1125
    %v1332 = vpop.f32.mrf.mxu0
    %v1333 = vadd.f32 %v1192, %v1332
    %v1334 = vpop.f32.mrf.mxu0
    %v1335 = vpop.f32.mrf.mxu0
    %v1336 = vadd.f32 %v1192, %v1335
    %v1337 = vpop.f32.mrf.mxu0
    %1338 = vmatprep.mubr.bf16.mxu0 %v1128
    %1339 = vmatmul.mubr.bf16.gmra.mxu0 %v1127
    %v1340 = vpop.f32.mrf.mxu0
    %v1341 = vadd.f32 %v1192, %v1340
    %v1342 = vpop.f32.mrf.mxu0
    %v1343 = vpop.f32.mrf.mxu0
    %v1344 = vadd.f32 %v1192, %v1343
    %v1345 = vpop.f32.mrf.mxu0
    %1346 = vmatprep.mubr.bf16.mxu0 %v1130
    %1347 = vmatmul.mubr.bf16.gmra.mxu0 %v1129
    %v1348 = vpop.f32.mrf.mxu0
    %v1349 = vadd.f32 %v1192, %v1348
    %v1350 = vpop.f32.mrf.mxu0
    %v1351 = vpop.f32.mrf.mxu0
    %v1352 = vadd.f32 %v1192, %v1351
    %v1353 = vpop.f32.mrf.mxu0
    %1354 = vmatprep.mubr.bf16.mxu0 %v1132
    %1355 = vmatmul.mubr.bf16.gmra.mxu0 %v1131
    %v1356 = vpop.f32.mrf.mxu0
    %v1357 = vadd.f32 %v1192, %v1356
    %v1358 = vpop.f32.mrf.mxu0
    %v1359 = vpop.f32.mrf.mxu0
    %v1360 = vadd.f32 %v1192, %v1359
    %v1361 = vpop.f32.mrf.mxu0
    %1362 = vmatprep.mubr.bf16.mxu0 %v1134
    %1363 = vmatmul.mubr.bf16.gmra.mxu0 %v1133
    %v1364 = vpop.f32.mrf.mxu0
    %v1365 = vadd.f32 %v1192, %v1364
    %v1366 = vpop.f32.mrf.mxu0
    %v1367 = vpop.f32.mrf.mxu0
    %v1368 = vadd.f32 %v1192, %v1367
    %v1369 = vpop.f32.mrf.mxu0
    %1370 = vmatprep.mubr.bf16.mxu0 %v1136
    %1371 = vmatmul.mubr.bf16.gmra.mxu0 %v1135
    %v1372 = vpop.f32.mrf.mxu0
    %v1373 = vadd.f32 %v1192, %v1372
    %v1374 = vpop.f32.mrf.mxu0
    %v1375 = vpop.f32.mrf.mxu0
    %v1376 = vadd.f32 %v1192, %v1375
    %v1377 = vpop.f32.mrf.mxu0
    %1378 = vmatprep.mubr.bf16.mxu0 %v1138
    %1379 = vmatmul.mubr.bf16.gmra.mxu0 %v1137
    %v1380 = vpop.f32.mrf.mxu0
    %v1381 = vadd.f32 %v1192, %v1380
    %v1382 = vpop.f32.mrf.mxu0
    %v1383 = vpop.f32.mrf.mxu0
    %v1384 = vadd.f32 %v1192, %v1383
    %v1385 = vpop.f32.mrf.mxu0
    %1386 = vmatprep.mubr.bf16.mxu0 %v1140
    %1387 = vmatmul.mubr.bf16.gmra.mxu0 %v1139
    %v1388 = vpop.f32.mrf.mxu0
    %v1389 = vadd.f32 %v1192, %v1388
    %v1390 = vpop.f32.mrf.mxu0
    %v1391 = vpop.f32.mrf.mxu0
    %v1392 = vadd.f32 %v1192, %v1391
    %v1393 = vpop.f32.mrf.mxu0
    %1394 = vmatprep.mubr.bf16.mxu0 %v1142
    %1395 = vmatmul.mubr.bf16.gmra.mxu0 %v1141
    %v1396 = vpop.f32.mrf.mxu0
    %v1397 = vadd.f32 %v1192, %v1396
    %v1398 = vpop.f32.mrf.mxu0
    %v1399 = vpop.f32.mrf.mxu0
    %v1400 = vadd.f32 %v1192, %v1399
    %v1401 = vpop.f32.mrf.mxu0
    %1402 = vmatprep.mubr.bf16.mxu0 %v1144
    %1403 = vmatmul.mubr.bf16.gmra.mxu0 %v1143
    %v1404 = vpop.f32.mrf.mxu0
    %v1405 = vadd.f32 %v1192, %v1404
    %v1406 = vpop.f32.mrf.mxu0
    %v1407 = vpop.f32.mrf.mxu0
    %v1408 = vadd.f32 %v1192, %v1407
    %v1409 = vpop.f32.mrf.mxu0
    %1410 = vmatprep.mubr.bf16.mxu0 %v1146
    %1411 = vmatmul.mubr.bf16.gmra.mxu0 %v1145
    %v1412 = vpop.f32.mrf.mxu0
    %v1413 = vadd.f32 %v1192, %v1412
    %v1414 = vpop.f32.mrf.mxu0
    %v1415 = vpop.f32.mrf.mxu0
    %v1416 = vadd.f32 %v1192, %v1415
    %v1417 = vpop.f32.mrf.mxu0
    %1418 = vmatprep.mubr.bf16.mxu0 %v1148
    %1419 = vmatmul.mubr.bf16.gmra.mxu0 %v1147
    %v1420 = vpop.f32.mrf.mxu0
    %v1421 = vadd.f32 %v1192, %v1420
    %v1422 = vpop.f32.mrf.mxu0
    %v1423 = vpop.f32.mrf.mxu0
    %v1424 = vadd.f32 %v1192, %v1423
    %v1425 = vpop.f32.mrf.mxu0
    %1426 = vmatprep.mubr.bf16.mxu0 %v1150
    %1427 = vmatmul.mubr.bf16.gmra.mxu0 %v1149
    %v1428 = vpop.f32.mrf.mxu0
    %v1429 = vadd.f32 %v1192, %v1428
    %v1430 = vpop.f32.mrf.mxu0
    %v1431 = vpop.f32.mrf.mxu0
    %v1432 = vadd.f32 %v1192, %v1431
    %v1433 = vpop.f32.mrf.mxu0
    %1434 = vmatprep.mubr.bf16.mxu0 %v1152
    %1435 = vmatmul.mubr.bf16.gmra.mxu0 %v1151
    %v1436 = vpop.f32.mrf.mxu0
    %v1437 = vadd.f32 %v1192, %v1436
    %v1438 = vpop.f32.mrf.mxu0
    %v1439 = vpop.f32.mrf.mxu0
    %v1440 = vadd.f32 %v1192, %v1439
    %v1441 = vpop.f32.mrf.mxu0
    %1442 = vmatprep.mubr.bf16.mxu0 %v1154
    %1443 = vmatmul.mubr.bf16.gmra.mxu0 %v1153
    %v1444 = vpop.f32.mrf.mxu0
    %v1445 = vadd.f32 %v1192, %v1444
    %v1446 = vpop.f32.mrf.mxu0
    %v1447 = vpop.f32.mrf.mxu0
    %v1448 = vadd.f32 %v1192, %v1447
    %v1449 = vpop.f32.mrf.mxu0
    %1450 = vdwg.mxu0
    %v1451 = vmax.f32 %v1325, 0.0
    %v1452 = vmax.f32 %v1328, 0.0
    %v1453 = vmax.f32 %v1333, 0.0
    %v1454 = vmax.f32 %v1336, 0.0
    %v1455 = vmax.f32 %v1341, 0.0
    %v1456 = vmax.f32 %v1344, 0.0
    %v1457 = vmax.f32 %v1349, 0.0
    %v1458 = vmax.f32 %v1352, 0.0
    %v1459 = vmax.f32 %v1357, 0.0
    %v1460 = vmax.f32 %v1360, 0.0
    %v1461 = vmax.f32 %v1365, 0.0
    %v1462 = vmax.f32 %v1368, 0.0
    %v1463 = vmax.f32 %v1373, 0.0
    %v1464 = vmax.f32 %v1376, 0.0
    %v1465 = vmax.f32 %v1381, 0.0
    %v1466 = vmax.f32 %v1384, 0.0
    %v1467 = vmax.f32 %v1389, 0.0
    %v1468 = vmax.f32 %v1392, 0.0
    %v1469 = vmax.f32 %v1397, 0.0
    %v1470 = vmax.f32 %v1400, 0.0
    %v1471 = vmax.f32 %v1405, 0.0
    %v1472 = vmax.f32 %v1408, 0.0
    %v1473 = vmax.f32 %v1413, 0.0
    %v1474 = vmax.f32 %v1416, 0.0
    %v1475 = vmax.f32 %v1421, 0.0
    %v1476 = vmax.f32 %v1424, 0.0
    %v1477 = vmax.f32 %v1429, 0.0
    %v1478 = vmax.f32 %v1432, 0.0
    %v1479 = vmax.f32 %v1437, 0.0
    %v1480 = vmax.f32 %v1440, 0.0
    %v1481 = vmax.f32 %v1445, 0.0
    %v1482 = vmax.f32 %v1448, 0.0
    %v1483 = vpack.c.bf16 %v1452, %v1451
    %v1484 = vpack.c.bf16 %v1454, %v1453
    %v1485 = vpack.c.bf16 %v1456, %v1455
    %v1486 = vpack.c.bf16 %v1458, %v1457
    %v1487 = vpack.c.bf16 %v1460, %v1459
    %v1488 = vpack.c.bf16 %v1462, %v1461
    %v1489 = vpack.c.bf16 %v1464, %v1463
    %v1490 = vpack.c.bf16 %v1466, %v1465
    %v1491 = vpack.c.bf16 %v1468, %v1467
    %v1492 = vpack.c.bf16 %v1470, %v1469
    %v1493 = vpack.c.bf16 %v1472, %v1471
    %v1494 = vpack.c.bf16 %v1474, %v1473
    %v1495 = vpack.c.bf16 %v1476, %v1475
    %v1496 = vpack.c.bf16 %v1478, %v1477
    %v1497 = vpack.c.bf16 %v1480, %v1479
    %v1498 = vpack.c.bf16 %v1482, %v1481
    %v1499 = vld [vmem:[%s9] sm:$0xf]
    %v1500 = vld [vmem:[%s9 + $0x4] sm:$0xf]
    %v1501 = vld [vmem:[%s9 + $0x8] sm:$0xf]
    %v1502 = vld [vmem:[%s9 + $0xc] sm:$0xf]
    %v1503 = vld [vmem:[%s9 + $0x10] sm:$0xf]
    %v1504 = vld [vmem:[%s9 + $0x14] sm:$0xf]
    %v1505 = vld [vmem:[%s9 + $0x18] sm:$0xf]
    %v1506 = vld [vmem:[%s9 + $0x1c] sm:$0xf]
    %v1507 = vld [vmem:[%s9 + $0x20] sm:$0xf]
    %v1508 = vld [vmem:[%s9 + $0x24] sm:$0xf]
    %v1509 = vld [vmem:[%s9 + $0x28] sm:$0xf]
    %v1510 = vld [vmem:[%s9 + $0x2c] sm:$0xf]
    %v1511 = vld [vmem:[%s9 + $0x30] sm:$0xf]
    %v1512 = vld [vmem:[%s9 + $0x34] sm:$0xf]
    %v1513 = vld [vmem:[%s9 + $0x38] sm:$0xf]
    %v1514 = vld [vmem:[%s9 + $0x3c] sm:$0xf]
    %v1515 = vld [vmem:[%s10] sm:$0x1]
    %v1517 = vlaneseq
    %v1518 = vshrl.u32 %v1517, 7
    %v1519 = vsub.s32 0, %v1518
    %v1520 = vrot.slane %v1515, %v1519
    %v1538 = vunpack.c.l.b16 %v1499
    %v1539 = vunpack.c.l.b16 %v1500
    %v1540 = vunpack.c.l.b16 %v1501
    %v1541 = vunpack.c.l.b16 %v1502
    %v1542 = vunpack.c.l.b16 %v1503
    %v1543 = vunpack.c.l.b16 %v1504
    %v1544 = vunpack.c.l.b16 %v1505
    %v1545 = vunpack.c.l.b16 %v1506
    %v1546 = vunpack.c.l.b16 %v1507
    %v1547 = vunpack.c.l.b16 %v1508
    %v1548 = vunpack.c.l.b16 %v1509
    %v1549 = vunpack.c.l.b16 %v1510
    %v1550 = vunpack.c.l.b16 %v1511
    %v1551 = vunpack.c.l.b16 %v1512
    %v1552 = vunpack.c.l.b16 %v1513
    %v1553 = vunpack.c.l.b16 %v1514
    %v1554 = vpack.c.b16 %v1539, %v1538
    %v1555 = vpack.c.b16 %v1541, %v1540
    %v1556 = vpack.c.b16 %v1543, %v1542
    %v1557 = vpack.c.b16 %v1545, %v1544
    %v1558 = vpack.c.b16 %v1547, %v1546
    %v1559 = vpack.c.b16 %v1549, %v1548
    %v1560 = vpack.c.b16 %v1551, %v1550
    %v1561 = vpack.c.b16 %v1553, %v1552
    %1570 = vmatprep.subr.bf16.mxu0 0
    %1571 = vmatpush1.bf16.msra.mxu0 %v1561
    %1572 = vmatprep.subr.bf16.mxu0 0
    %1573 = vmatpush1.bf16.msra.mxu0 %v1560
    %1574 = vmatprep.subr.bf16.mxu0 0
    %1575 = vmatpush1.bf16.msra.mxu0 %v1559
    %1576 = vmatprep.subr.bf16.mxu0 0
    %1577 = vmatpush1.bf16.msra.mxu0 %v1558
    %1578 = vmatprep.subr.bf16.mxu0 0
    %1579 = vmatpush1.bf16.msra.mxu0 %v1557
    %1580 = vmatprep.subr.bf16.mxu0 0
    %1581 = vmatpush1.bf16.msra.mxu0 %v1556
    %1582 = vmatprep.subr.bf16.mxu0 0
    %1583 = vmatpush1.bf16.msra.mxu0 %v1555
    %1584 = vmatprep.subr.bf16.mxu0 0
    %1585 = vmatpush1.bf16.msra.mxu0 %v1554
    %1586 = vmatprep.subr.bf16.mxu0 0
    %1587 = vmatpush2.bf16.msra.mxu0 0
    %1588 = vmatprep.subr.bf16.mxu0 0
    %1589 = vmatpush2.bf16.msra.mxu0 0
    %1590 = vmatprep.subr.bf16.mxu0 0
    %1591 = vmatpush2.bf16.msra.mxu0 0
    %1592 = vmatprep.subr.bf16.mxu0 0
    %1593 = vmatpush2.bf16.msra.mxu0 0
    %1594 = vmatprep.subr.bf16.mxu0 0
    %1595 = vmatpush2.bf16.msra.mxu0 0
    %1596 = vmatprep.subr.bf16.mxu0 0
    %1597 = vmatpush2.bf16.msra.mxu0 0
    %1598 = vmatprep.subr.bf16.mxu0 0
    %1599 = vmatpush2.bf16.msra.mxu0 0
    %1600 = vmatprep.subr.bf16.mxu0 0
    %1601 = vmatpush2.bf16.msra.mxu0 0
    %1602 = vmatprep.mubr.bf16.mxu0 0
    %1603 = vmatmul.mubr.bf16.gmra.mxu0 %v1483
    %v1604 = vpop.f32.mrf.mxu0
    %v1605 = vadd.f32 %v1520, %v1604
    %v1606 = vpop.f32.mrf.mxu0
    %v1607 = vpop.f32.mrf.mxu0
    %v1608 = vadd.f32 %v1520, %v1607
    %v1609 = vpop.f32.mrf.mxu0
    %1610 = vmatprep.mubr.bf16.mxu0 0
    %1611 = vmatmul.mubr.bf16.gmra.mxu0 %v1484
    %v1612 = vpop.f32.mrf.mxu0
    %v1613 = vadd.f32 %v1520, %v1612
    %v1614 = vpop.f32.mrf.mxu0
    %v1615 = vpop.f32.mrf.mxu0
    %v1616 = vadd.f32 %v1520, %v1615
    %v1617 = vpop.f32.mrf.mxu0
    %1618 = vmatprep.mubr.bf16.mxu0 0
    %1619 = vmatmul.mubr.bf16.gmra.mxu0 %v1485
    %v1620 = vpop.f32.mrf.mxu0
    %v1621 = vadd.f32 %v1520, %v1620
    %v1622 = vpop.f32.mrf.mxu0
    %v1623 = vpop.f32.mrf.mxu0
    %v1624 = vadd.f32 %v1520, %v1623
    %v1625 = vpop.f32.mrf.mxu0
    %1626 = vmatprep.mubr.bf16.mxu0 0
    %1627 = vmatmul.mubr.bf16.gmra.mxu0 %v1486
    %v1628 = vpop.f32.mrf.mxu0
    %v1629 = vadd.f32 %v1520, %v1628
    %v1630 = vpop.f32.mrf.mxu0
    %v1631 = vpop.f32.mrf.mxu0
    %v1632 = vadd.f32 %v1520, %v1631
    %v1633 = vpop.f32.mrf.mxu0
    %1634 = vmatprep.mubr.bf16.mxu0 0
    %1635 = vmatmul.mubr.bf16.gmra.mxu0 %v1487
    %v1636 = vpop.f32.mrf.mxu0
    %v1637 = vadd.f32 %v1520, %v1636
    %v1638 = vpop.f32.mrf.mxu0
    %v1639 = vpop.f32.mrf.mxu0
    %v1640 = vadd.f32 %v1520, %v1639
    %v1641 = vpop.f32.mrf.mxu0
    %1642 = vmatprep.mubr.bf16.mxu0 0
    %1643 = vmatmul.mubr.bf16.gmra.mxu0 %v1488
    %v1644 = vpop.f32.mrf.mxu0
    %v1645 = vadd.f32 %v1520, %v1644
    %v1646 = vpop.f32.mrf.mxu0
    %v1647 = vpop.f32.mrf.mxu0
    %v1648 = vadd.f32 %v1520, %v1647
    %v1649 = vpop.f32.mrf.mxu0
    %1650 = vmatprep.mubr.bf16.mxu0 0
    %1651 = vmatmul.mubr.bf16.gmra.mxu0 %v1489
    %v1652 = vpop.f32.mrf.mxu0
    %v1653 = vadd.f32 %v1520, %v1652
    %v1654 = vpop.f32.mrf.mxu0
    %v1655 = vpop.f32.mrf.mxu0
    %v1656 = vadd.f32 %v1520, %v1655
    %v1657 = vpop.f32.mrf.mxu0
    %1658 = vmatprep.mubr.bf16.mxu0 0
    %1659 = vmatmul.mubr.bf16.gmra.mxu0 %v1490
    %v1660 = vpop.f32.mrf.mxu0
    %v1661 = vadd.f32 %v1520, %v1660
    %v1662 = vpop.f32.mrf.mxu0
    %v1663 = vpop.f32.mrf.mxu0
    %v1664 = vadd.f32 %v1520, %v1663
    %v1665 = vpop.f32.mrf.mxu0
    %1666 = vmatprep.mubr.bf16.mxu0 0
    %1667 = vmatmul.mubr.bf16.gmra.mxu0 %v1491
    %v1668 = vpop.f32.mrf.mxu0
    %v1669 = vadd.f32 %v1520, %v1668
    %v1670 = vpop.f32.mrf.mxu0
    %v1671 = vpop.f32.mrf.mxu0
    %v1672 = vadd.f32 %v1520, %v1671
    %v1673 = vpop.f32.mrf.mxu0
    %1674 = vmatprep.mubr.bf16.mxu0 0
    %1675 = vmatmul.mubr.bf16.gmra.mxu0 %v1492
    %v1676 = vpop.f32.mrf.mxu0
    %v1677 = vadd.f32 %v1520, %v1676
    %v1678 = vpop.f32.mrf.mxu0
    %v1679 = vpop.f32.mrf.mxu0
    %v1680 = vadd.f32 %v1520, %v1679
    %v1681 = vpop.f32.mrf.mxu0
    %1682 = vmatprep.mubr.bf16.mxu0 0
    %1683 = vmatmul.mubr.bf16.gmra.mxu0 %v1493
    %v1684 = vpop.f32.mrf.mxu0
    %v1685 = vadd.f32 %v1520, %v1684
    %v1686 = vpop.f32.mrf.mxu0
    %v1687 = vpop.f32.mrf.mxu0
    %v1688 = vadd.f32 %v1520, %v1687
    %v1689 = vpop.f32.mrf.mxu0
    %1690 = vmatprep.mubr.bf16.mxu0 0
    %1691 = vmatmul.mubr.bf16.gmra.mxu0 %v1494
    %v1692 = vpop.f32.mrf.mxu0
    %v1693 = vadd.f32 %v1520, %v1692
    %v1694 = vpop.f32.mrf.mxu0
    %v1695 = vpop.f32.mrf.mxu0
    %v1696 = vadd.f32 %v1520, %v1695
    %v1697 = vpop.f32.mrf.mxu0
    %1698 = vmatprep.mubr.bf16.mxu0 0
    %1699 = vmatmul.mubr.bf16.gmra.mxu0 %v1495
    %v1700 = vpop.f32.mrf.mxu0
    %v1701 = vadd.f32 %v1520, %v1700
    %v1702 = vpop.f32.mrf.mxu0
    %v1703 = vpop.f32.mrf.mxu0
    %v1704 = vadd.f32 %v1520, %v1703
    %v1705 = vpop.f32.mrf.mxu0
    %1706 = vmatprep.mubr.bf16.mxu0 0
    %1707 = vmatmul.mubr.bf16.gmra.mxu0 %v1496
    %v1708 = vpop.f32.mrf.mxu0
    %v1709 = vadd.f32 %v1520, %v1708
    %v1710 = vpop.f32.mrf.mxu0
    %v1711 = vpop.f32.mrf.mxu0
    %v1712 = vadd.f32 %v1520, %v1711
    %v1713 = vpop.f32.mrf.mxu0
    %1714 = vmatprep.mubr.bf16.mxu0 0
    %1715 = vmatmul.mubr.bf16.gmra.mxu0 %v1497
    %v1716 = vpop.f32.mrf.mxu0
    %v1717 = vadd.f32 %v1520, %v1716
    %v1718 = vpop.f32.mrf.mxu0
    %v1719 = vpop.f32.mrf.mxu0
    %v1720 = vadd.f32 %v1520, %v1719
    %v1721 = vpop.f32.mrf.mxu0
    %1722 = vmatprep.mubr.bf16.mxu0 0
    %1723 = vmatmul.mubr.bf16.gmra.mxu0 %v1498
    %v1724 = vpop.f32.mrf.mxu0
    %v1725 = vadd.f32 %v1520, %v1724
    %v1726 = vpop.f32.mrf.mxu0
    %v1727 = vpop.f32.mrf.mxu0
    %v1728 = vadd.f32 %v1520, %v1727
    %v1729 = vpop.f32.mrf.mxu0
    %1730 = vdwg.mxu0
    %1731 = vst [vmem:[%s11] sm:$0xff] %v1605
    %1732 = vst [vmem:[%s11 + $0x8] sm:$0xff] %v1608
    %1733 = vst [vmem:[%s11 + $0x10] sm:$0xff] %v1613
    %1734 = vst [vmem:[%s11 + $0x18] sm:$0xff] %v1616
    %1735 = vst [vmem:[%s11 + $0x20] sm:$0xff] %v1621
    %1736 = vst [vmem:[%s11 + $0x28] sm:$0xff] %v1624
    %1737 = vst [vmem:[%s11 + $0x30] sm:$0xff] %v1629
    %1738 = vst [vmem:[%s11 + $0x38] sm:$0xff] %v1632
    %1739 = vst [vmem:[%s11 + $0x40] sm:$0xff] %v1637
    %1740 = vst [vmem:[%s11 + $0x48] sm:$0xff] %v1640
    %1741 = vst [vmem:[%s11 + $0x50] sm:$0xff] %v1645
    %1742 = vst [vmem:[%s11 + $0x58] sm:$0xff] %v1648
    %1743 = vst [vmem:[%s11 + $0x60] sm:$0xff] %v1653
    %1744 = vst [vmem:[%s11 + $0x68] sm:$0xff] %v1656
    %1745 = vst [vmem:[%s11 + $0x70] sm:$0xff] %v1661
    %1746 = vst [vmem:[%s11 + $0x78] sm:$0xff] %v1664
    %1747 = vst [vmem:[%s11 + $0x80] sm:$0xff] %v1669
    %1748 = vst [vmem:[%s11 + $0x88] sm:$0xff] %v1672
    %1749 = vst [vmem:[%s11 + $0x90] sm:$0xff] %v1677
    %1750 = vst [vmem:[%s11 + $0x98] sm:$0xff] %v1680
    %1751 = vst [vmem:[%s11 + $0xa0] sm:$0xff] %v1685
    %1752 = vst [vmem:[%s11 + $0xa8] sm:$0xff] %v1688
    %1753 = vst [vmem:[%s11 + $0xb0] sm:$0xff] %v1693
    %1754 = vst [vmem:[%s11 + $0xb8] sm:$0xff] %v1696
    %1755 = vst [vmem:[%s11 + $0xc0] sm:$0xff] %v1701
    %1756 = vst [vmem:[%s11 + $0xc8] sm:$0xff] %v1704
    %1757 = vst [vmem:[%s11 + $0xd0] sm:$0xff] %v1709
    %1758 = vst [vmem:[%s11 + $0xd8] sm:$0xff] %v1712
    %1759 = vst [vmem:[%s11 + $0xe0] sm:$0xff] %v1717
    %1760 = vst [vmem:[%s11 + $0xe8] sm:$0xff] %v1720
    %1761 = vst [vmem:[%s11 + $0xf0] sm:$0xff] %v1725
    %1762 = vst [vmem:[%s11 + $0xf8] sm:$0xff] %v1728
    // Predicated region
    $region50: #{net_forward.1} parent=1 // pred_check
      _
    $region51: #{net_forward.1} parent=1 // pred_check_branch
      %1764 = sbr.rel (0) target = $region53
    $region52: #{net_forward.1} parent=1 // pred_region
      _
    $region53: #{net_forward.1} parent=1 // pred_fallthru
      _
    // Predicated region
    $region54: #{net_forward.1} parent=1 // pred_check
      _
    $region55: #{net_forward.1} parent=1 // pred_check_branch
      %1766 = sbr.rel (0) target = $region57
    $region56: #{net_forward.1} parent=1 // pred_region
      _
    $region57: #{net_forward.1} parent=1 // pred_fallthru
      _
    %1767 = vsyncpa [#allocation3], 1

</llo_original>
